<compile_context>
chip_gen: v6e
topology: v6e:2x2x1
jax: 0.10.0
libtpu: 0.0.40
codegen_flags: <defaults>
</compile_context>

<pallas_src>
import functools

import jax
import jax.numpy as jnp
from jax.experimental import pallas as pl
from jax.experimental.pallas import tpu as pltpu


def _round_up(x, m):
    return (x + m - 1) // m * m


# ----------------------------------------------------------------------------- kernel
def rvae_kernel(
    bulk_dtype,
    x_ref,       # [Tc, Bb, D]   time-major input chunk
    eps_ref,     # [Tc, Bb, L]   pre-sampled N(0,1) noise chunk
    wih4_ref,    # [D, 4H]       fused LSTM input->gate weights (gate order i,f,g,o)
    whh4_ref,    # [H, 4H]       fused LSTM hidden->gate weights
    b4_ref,      # [1, 4H]       combined bias (b_ih + b_hh)
    wproj_ref,   # [H, W]        [mu | logvar | 0 | x_recon(h-part) | 0-pad]
    bproj_ref,   # [1, W]        [b_mu | b_logvar | 0 | b_dec | 0-pad]
    wz_ref,      # [L, W]        [0 | 0 | I_L | fc_dec z-part | 0-pad]
    out_ref,     # [Tc, Bb, W]   fused lane-dense output slab
    hx_ref,      # [Bb, H]       persistent carry: hidden state
    cx_ref,      # [Bb, H]       persistent carry: cell state
    xg_ref,      # [Tc, Bb, 4H]  scratch: hoisted input projection
    h_all_ref,   # [Tc, Bb, H]   scratch: per-step hidden states
):
    Tc, Bb, D = x_ref.shape
    H = whh4_ref.shape[0]
    L = eps_ref.shape[-1]
    W = out_ref.shape[-1]
    ti = pl.program_id(1)

    def bulk_dot(a, b):
        # Bulk, off-critical-path matmuls may run in bf16 on v6e/v7x (flag in the wrapper).
        if bulk_dtype is not None:
            a = a.astype(bulk_dtype)
            b = b.astype(bulk_dtype)
        return jnp.dot(a, b, preferred_element_type=jnp.float32)

    @pl.when(ti == 0)
    def _():
        hx_ref[...] = jnp.zeros_like(hx_ref)
        cx_ref[...] = jnp.zeros_like(cx_ref)

    # ---- hoisted input projection for the chunk: one MXU matmul, staged through VMEM ----
    x2d = x_ref[...].reshape(Tc * Bb, D)
    xg_ref[...] = (bulk_dot(x2d, wih4_ref[...]) + b4_ref[...]).reshape(Tc, Bb, 4 * H)

    whh4 = whh4_ref[...]                       # load once, reuse every step
    hx = hx_ref[...]
    cx = cx_ref[...]

    # Lane mask selecting the g-gate block (hoisted: computed once per chunk).
    col = jax.lax.broadcasted_iota(jnp.int32, (Bb, 4 * H), 1)
    g_mask = (col >= 2 * H) & (col < 3 * H)

    # ---- fully-unrolled serial recurrence over the chunk ----
    # Per step only hx @ Whh4 + full-tile gate activations + elementwise cell update.
    for tt in range(Tc):
        gates = xg_ref[tt] + jnp.dot(hx, whh4, preferred_element_type=jnp.float32)
        act = jnp.where(g_mask, jnp.tanh(gates), jax.nn.sigmoid(gates))
        i_g = act[:, 0 * H:1 * H]
        f_g = act[:, 1 * H:2 * H]
        g_g = act[:, 2 * H:3 * H]
        o_g = act[:, 3 * H:4 * H]
        cx = f_g * cx + i_g * g_g
        hx = o_g * jnp.tanh(cx)
        h_all_ref[tt] = hx

    hx_ref[...] = hx
    cx_ref[...] = cx

    # ---- fused post-loop projections -> one lane-dense output slab ----
    #   proj = [mu | logvar | 0 | hx @ Wdec_h + b_dec | 0]
    #   out  = proj + z @ Wz_pad   (identity block writes z, wdz block completes x_recon)
    h2d = h_all_ref[...].reshape(Tc * Bb, H)
    eps2d = eps_ref[...].reshape(Tc * Bb, L)
    proj = bulk_dot(h2d, wproj_ref[...]) + bproj_ref[...]
    mu = proj[:, 0:L]
    lv = proj[:, L:2 * L]
    z = mu + eps2d * jnp.exp(0.5 * lv)
    out = proj + jnp.dot(z, wz_ref[...], preferred_element_type=jnp.float32)
    out_ref[...] = out.reshape(Tc, Bb, W)      # single unmasked full-width store


# ----------------------------------------------------------------------------- wrapper
@functools.partial(jax.jit, static_argnames=("time_chunk", "batch_chunk", "bulk_dtype"))
def recurrent_vae_forward(x_seq, eps_seq, fused, *, time_chunk=None, batch_chunk=None,
                          bulk_dtype=None):
    """x_seq: [B, T, D], eps_seq: [B, T, L] (PyTorch layout). Returns (x_recon, mu, logvar, z)."""
    B, T, D = x_seq.shape
    L = eps_seq.shape[-1]
    H = fused["whh4"].shape[0]
    W = fused["wproj_pad"].shape[1]

    Bp = _round_up(B, 8)                                   # sublane-aligned batch
    Bb = batch_chunk if batch_chunk is not None else Bp    # batch chunk ("parallel" axis)
    Tc = time_chunk if time_chunk is not None else T       # time chunk ("arbitrary" axis)
    assert Bp % Bb == 0 and Bb % 8 == 0 and T % Tc == 0, (Bp, Bb, T, Tc)

    def to_time_major(a):
        a = jnp.pad(a.astype(jnp.float32), ((0, Bp - B), (0, 0), (0, 0)))
        return jnp.transpose(a, (1, 0, 2))                 # [T, Bp, C]

    x_tm = to_time_major(x_seq)
    eps_tm = to_time_major(eps_seq)

    grid = (Bp // Bb, T // Tc)

    def chunk_spec(c):
        return pl.BlockSpec((Tc, Bb, c), lambda bi, ti: (ti, bi, 0))

    def full_spec(shape):
        return pl.BlockSpec(shape, lambda bi, ti: (0, 0))

    # VMEM residency per grid step (double-buffered chunks + resident weights + scratch),
    # chunk-bounded so it fits v7x's 64 MiB as well as v5e/v6e defaults.
    est = 4 * (
        2 * Tc * Bb * (D + L + W)
        + 2 * (D * 4 * H + H * 4 * H + 4 * H + H * W + W + L * W)
        + 2 * Bb * H + Tc * Bb * 4 * H + Tc * Bb * H
    )
    vmem_limit = min(64 * 1024 * 1024, max(16 * 1024 * 1024, 2 * est))

    out_tm = pl.pallas_call(
        functools.partial(rvae_kernel, bulk_dtype),
        out_shape=jax.ShapeDtypeStruct((T, Bp, W), jnp.float32),
        grid_spec=pltpu.PrefetchScalarGridSpec(
            num_scalar_prefetch=0,
            grid=grid,
            in_specs=[
                chunk_spec(D),                              # x chunk
                chunk_spec(L),                              # eps chunk
                full_spec(fused["wih4"].shape),
                full_spec(fused["whh4"].shape),
                full_spec(fused["b4"].shape),
                full_spec(fused["wproj_pad"].shape),
                full_spec(fused["bproj_pad"].shape),
                full_spec(fused["wz_pad"].shape),
            ],
            out_specs=pl.BlockSpec((Tc, Bb, W), lambda bi, ti: (ti, bi, 0)),
            scratch_shapes=[
                pltpu.VMEM((Bb, H), jnp.float32),           # hx carry (persists across time chunks)
                pltpu.VMEM((Bb, H), jnp.float32),           # cx carry
                pltpu.VMEM((Tc, Bb, 4 * H), jnp.float32),   # staged input projection
                pltpu.VMEM((Tc, Bb, H), jnp.float32),       # per-step hidden states
            ],
        ),
        compiler_params=pltpu.CompilerParams(
            dimension_semantics=("parallel", "arbitrary"),
            vmem_limit_bytes=vmem_limit,
        ),
    )(
        x_tm, eps_tm,
        fused["wih4"], fused["whh4"], fused["b4"],
        fused["wproj_pad"], fused["bproj_pad"], fused["wz_pad"],
    )

    out = jnp.transpose(out_tm, (1, 0, 2))[:B]              # [B, T, W] -> drop batch padding
    mu = out[..., 0:L]
    lv = out[..., L:2 * L]
    z = out[..., 2 * L:3 * L]
    xr = out[..., 3 * L:3 * L + D]
    return xr, mu, lv, z


# ----------------------------------------------------------------------------- params
def init_params(key, input_dim, hidden_dim, latent_dim):
    ks = jax.random.split(key, 10)
    s = 0.1
    # LSTMCell params, gate order (i, f, g, o), pre-transposed to [in, out].
    wih = s * jax.random.normal(ks[0], (4, input_dim, hidden_dim), jnp.float32)
    whh = s * jax.random.normal(ks[1], (4, hidden_dim, hidden_dim), jnp.float32)
    b_ih = s * jax.random.normal(ks[2], (4, 1, hidden_dim), jnp.float32)
    b_hh = s * jax.random.normal(ks[3], (4, 1, hidden_dim), jnp.float32)
    b = b_ih + b_hh
    wmu = s * jax.random.normal(ks[4], (hidden_dim, latent_dim), jnp.float32)
    bmu = s * jax.random.normal(ks[5], (1, latent_dim), jnp.float32)
    wlv = s * jax.random.normal(ks[6], (hidden_dim, latent_dim), jnp.float32)
    blv = s * jax.random.normal(ks[7], (1, latent_dim), jnp.float32)
    wdec = s * jax.random.normal(
        ks[8], (hidden_dim + latent_dim, input_dim), jnp.float32
    )
    bd = s * jax.random.normal(ks[9], (1, input_dim), jnp.float32)
    return dict(
        wih=wih, whh=whh, b=b,
        wmu=wmu, bmu=bmu, wlv=wlv, blv=blv,
        wdh=wdec[:hidden_dim], wdz=wdec[hidden_dim:], bd=bd,
    )


def fuse_params(p):
    """Pre-fuse & lane-pad weights for the kernel (done once, outside the hot path)."""
    H, L = p["wmu"].shape
    D = p["wdz"].shape[1]
    W = _round_up(3 * L + D, 128)          # lane-dense output-slab width

    wih4 = jnp.concatenate(list(p["wih"]), axis=1)     # [D, 4H]
    whh4 = jnp.concatenate(list(p["whh"]), axis=1)     # [H, 4H]
    b4 = jnp.concatenate(list(p["b"]), axis=1)         # [1, 4H]

    # Output-slab column layout: [mu (L) | logvar (L) | z (L) | x_recon (D) | zero pad].
    wproj = jnp.zeros((H, W), jnp.float32)
    wproj = wproj.at[:, 0:L].set(p["wmu"])
    wproj = wproj.at[:, L:2 * L].set(p["wlv"])
    wproj = wproj.at[:, 3 * L:3 * L + D].set(p["wdh"])
    bproj = jnp.zeros((1, W), jnp.float32)
    bproj = bproj.at[:, 0:L].set(p["bmu"])
    bproj = bproj.at[:, L:2 * L].set(p["blv"])
    bproj = bproj.at[:, 3 * L:3 * L + D].set(p["bd"])
    wz = jnp.zeros((L, W), jnp.float32)
    wz = wz.at[:, 2 * L:3 * L].set(jnp.eye(L, dtype=jnp.float32))
    wz = wz.at[:, 3 * L:3 * L + D].set(p["wdz"])
    return dict(wih4=wih4, whh4=whh4, b4=b4,
                wproj_pad=wproj, bproj_pad=bproj, wz_pad=wz)


# ----------------------------------------------------------------------------- pure-JAX reference
def recurrent_vae_reference(x_seq, eps_seq, params):
    B, T, D = x_seq.shape
    H = params["whh"].shape[-1]
    hx = jnp.zeros((B, H), jnp.float32)
    cx = jnp.zeros((B, H), jnp.float32)
    xr_l, mu_l, lv_l, z_l = [], [], [], []
    for t in range(T):
        x_t = x_seq[:, t, :]
        gates = [
            x_t @ params["wih"][k] + hx @ params["whh"][k] + params["b"][k]
            for k in range(4)
        ]
        i_g = jax.nn.sigmoid(gates[0])
        f_g = jax.nn.sigmoid(gates[1])
        g_g = jnp.tanh(gates[2])
        o_g = jax.nn.sigmoid(gates[3])
        cx = f_g * cx + i_g * g_g
        hx = o_g * jnp.tanh(cx)
        mu_t = hx @ params["wmu"] + params["bmu"]
        lv_t = hx @ params["wlv"] + params["blv"]
        z_t = mu_t + eps_seq[:, t, :] * jnp.exp(0.5 * lv_t)
        xr_t = hx @ params["wdh"] + z_t @ params["wdz"] + params["bd"]
        xr_l.append(xr_t)
        mu_l.append(mu_t)
        lv_l.append(lv_t)
        z_l.append(z_t)
    stack = lambda lst: jnp.stack(lst, axis=1)
    return stack(xr_l), stack(mu_l), stack(lv_l), stack(z_l)


# ----------------------------------------------------------------------------- main
if __name__ == "__main__":
    INPUT_DIM, HIDDEN_DIM, LATENT_DIM = 2, 16, 2
    BATCH, SEQ = 2, 8

    root = jax.random.PRNGKey(0)
    k_p, k_x, k_eps = jax.random.split(root, 3)

    params = init_params(k_p, INPUT_DIM, HIDDEN_DIM, LATENT_DIM)
    fused = fuse_params(params)
    x_seq = jax.random.normal(k_x, (BATCH, SEQ, INPUT_DIM), jnp.float32)
    eps_seq = jax.random.normal(k_eps, (BATCH, SEQ, LATENT_DIM), jnp.float32)

    # time_chunk=4 exercises the pipelined "arbitrary" time grid with carried hx/cx.
    # Set bulk_dtype=jnp.bfloat16 for the v6e/v7x bulk-matmul fast path (loosen tolerance).
    outs = jax.block_until_ready(
        recurrent_vae_forward(x_seq, eps_seq, fused, time_chunk=4)
    )
    refs = recurrent_vae_reference(x_seq, eps_seq, params)
    names = ("x_recon", "mu", "logvar", "z")
    for n, o, r in zip(names, outs, refs):
        assert o.shape == r.shape, (n, o.shape, r.shape)
        assert jnp.allclose(o, r, atol=1e-4, rtol=1e-4), (n, float(jnp.abs(o - r).max()))

    print("KERNEL_OK")
</pallas_src>

<mosaic_0001>
module attributes {stable_mosaic.version = 11 : i64} {
  func.func @rvae_kernel(%arg0: i32, %arg1: i32, %arg2: memref<4x8x2xf32, #tpu.memory_space<vmem>>, %arg3: memref<4x8x2xf32, #tpu.memory_space<vmem>>, %arg4: memref<2x64xf32, #tpu.memory_space<vmem>>, %arg5: memref<16x64xf32, #tpu.memory_space<vmem>>, %arg6: memref<1x64xf32, #tpu.memory_space<vmem>>, %arg7: memref<16x128xf32, #tpu.memory_space<vmem>>, %arg8: memref<1x128xf32, #tpu.memory_space<vmem>>, %arg9: memref<2x128xf32, #tpu.memory_space<vmem>>, %arg10: memref<4x8x128xf32, #tpu.memory_space<vmem>>, %arg11: memref<8x16xf32, #tpu.memory_space<vmem>>, %arg12: memref<8x16xf32, #tpu.memory_space<vmem>>, %arg13: memref<4x8x64xf32, #tpu.memory_space<vmem>>, %arg14: memref<4x8x16xf32, #tpu.memory_space<vmem>>) attributes {dimension_semantics = [#tpu.dimension_semantics<parallel>, #tpu.dimension_semantics<arbitrary>], iteration_bounds = array<i64: 1, 2>, scalar_prefetch = 0 : i64, scratch_operands = 4 : i64, tpu.core_type = #tpu.core_type<tc>, window_params = [{transform_indices = @transform_0, window_bounds = array<i64: 4, 8, 2>}, {transform_indices = @transform_1, window_bounds = array<i64: 4, 8, 2>}, {pipeline_mode = #tpu.pipeline_mode<synchronous>, transform_indices = @transform_2, window_bounds = array<i64: 2, 64>}, {pipeline_mode = #tpu.pipeline_mode<synchronous>, transform_indices = @transform_3, window_bounds = array<i64: 16, 64>}, {pipeline_mode = #tpu.pipeline_mode<synchronous>, transform_indices = @transform_4, window_bounds = array<i64: 1, 64>}, {pipeline_mode = #tpu.pipeline_mode<synchronous>, transform_indices = @transform_5, window_bounds = array<i64: 16, 128>}, {pipeline_mode = #tpu.pipeline_mode<synchronous>, transform_indices = @transform_6, window_bounds = array<i64: 1, 128>}, {pipeline_mode = #tpu.pipeline_mode<synchronous>, transform_indices = @transform_7, window_bounds = array<i64: 2, 128>}, {transform_indices = @transform_8, window_bounds = array<i64: 4, 8, 128>}]} {
    %c0_i32 = arith.constant 0 : i32
    %0 = arith.cmpi eq, %arg1, %c0_i32 : i32
    %1 = arith.extui %0 : i1 to i32
    %c0_i32_0 = arith.constant 0 : i32
    %2 = arith.cmpi ne, %1, %c0_i32_0 : i32
    scf.if %2 {
      %cst_67 = arith.constant 0.000000e+00 : f32
      %136 = vector.broadcast %cst_67 : f32 to vector<8x16xf32>
      %c0_68 = arith.constant 0 : index
      %c0_69 = arith.constant 0 : index
      %137 = vector.load %arg11[%c0_68, %c0_69] : memref<8x16xf32, #tpu.memory_space<vmem>>, vector<8x16xf32>
      tpu.vector_store %arg11[%c0_68, %c0_69], %136 {strides = array<i32>} : memref<8x16xf32, #tpu.memory_space<vmem>>, vector<8x16xf32>,
      %cst_70 = arith.constant 0.000000e+00 : f32
      %138 = vector.broadcast %cst_70 : f32 to vector<8x16xf32>
      %c0_71 = arith.constant 0 : index
      %c0_72 = arith.constant 0 : index
      %139 = vector.load %arg12[%c0_71, %c0_72] : memref<8x16xf32, #tpu.memory_space<vmem>>, vector<8x16xf32>
      tpu.vector_store %arg12[%c0_71, %c0_72], %138 {strides = array<i32>} : memref<8x16xf32, #tpu.memory_space<vmem>>, vector<8x16xf32>,
    } else {
    }
    %c0 = arith.constant 0 : index
    %c0_1 = arith.constant 0 : index
    %c0_2 = arith.constant 0 : index
    %3 = vector.load %arg2[%c0, %c0_1, %c0_2] : memref<4x8x2xf32, #tpu.memory_space<vmem>>, vector<4x8x2xf32>
    %4 = vector.shape_cast %3 : vector<4x8x2xf32> to vector<32x2xf32>
    %c0_3 = arith.constant 0 : index
    %c0_4 = arith.constant 0 : index
    %5 = vector.load %arg4[%c0_3, %c0_4] : memref<2x64xf32, #tpu.memory_space<vmem>>, vector<2x64xf32>
    %cst = arith.constant dense<0.000000e+00> : vector<32x64xf32>
    %6 = tpu.matmul %4, %5, %cst {dimension_numbers = #tpu.dot_dimension_numbers<[1], [0], [0], [1], [0, 0, 1, 1], [], []>} : vector<32x2xf32>, vector<2x64xf32>, vector<32x64xf32> -> vector<32x64xf32>
    %c0_5 = arith.constant 0 : index
    %c0_6 = arith.constant 0 : index
    %7 = vector.load %arg6[%c0_5, %c0_6] : memref<1x64xf32, #tpu.memory_space<vmem>>, vector<1x64xf32>
    %8 = vector.broadcast %7 : vector<1x64xf32> to vector<32x64xf32>
    %9 = arith.addf %6, %8 : vector<32x64xf32>
    %10 = vector.shape_cast %9 : vector<32x64xf32> to vector<4x8x64xf32>
    %c0_7 = arith.constant 0 : index
    %c0_8 = arith.constant 0 : index
    %c0_9 = arith.constant 0 : index
    %11 = vector.load %arg13[%c0_7, %c0_8, %c0_9] : memref<4x8x64xf32, #tpu.memory_space<vmem>>, vector<4x8x64xf32>
    tpu.vector_store %arg13[%c0_7, %c0_8, %c0_9], %10 {strides = array<i32>} : memref<4x8x64xf32, #tpu.memory_space<vmem>>, vector<4x8x64xf32>,
    %c0_10 = arith.constant 0 : index
    %c0_11 = arith.constant 0 : index
    %12 = vector.load %arg5[%c0_10, %c0_11] : memref<16x64xf32, #tpu.memory_space<vmem>>, vector<16x64xf32>
    %c0_12 = arith.constant 0 : index
    %c0_13 = arith.constant 0 : index
    %13 = vector.load %arg11[%c0_12, %c0_13] : memref<8x16xf32, #tpu.memory_space<vmem>>, vector<8x16xf32>
    %c0_14 = arith.constant 0 : index
    %c0_15 = arith.constant 0 : index
    %14 = vector.load %arg12[%c0_14, %c0_15] : memref<8x16xf32, #tpu.memory_space<vmem>>, vector<8x16xf32>
    %15 = tpu.iota {dimensions = array<i32: 1>} : vector<8x64xi32>
    %c32_i32 = arith.constant 32 : i32
    %16 = vector.broadcast %c32_i32 : i32 to vector<8x64xi32>
    %17 = arith.cmpi sge, %15, %16 : vector<8x64xi32>
    %c48_i32 = arith.constant 48 : i32
    %18 = vector.broadcast %c48_i32 : i32 to vector<8x64xi32>
    %19 = arith.cmpi slt, %15, %18 : vector<8x64xi32>
    %20 = arith.andi %17, %19 : vector<8x64xi1>
    %c0_16 = arith.constant 0 : index
    %c0_17 = arith.constant 0 : index
    %c0_18 = arith.constant 0 : index
    %21 = vector.load %arg13[%c0_16, %c0_17, %c0_18] : memref<4x8x64xf32, #tpu.memory_space<vmem>>, vector<1x8x64xf32>
    %22 = vector.shape_cast %21 : vector<1x8x64xf32> to vector<8x64xf32>
    %cst_19 = arith.constant dense<0.000000e+00> : vector<8x64xf32>
    %23 = tpu.matmul %13, %12, %cst_19 {dimension_numbers = #tpu.dot_dimension_numbers<[1], [0], [0], [1], [0, 0, 1, 1], [], []>} : vector<8x16xf32>, vector<16x64xf32>, vector<8x64xf32> -> vector<8x64xf32>
    %24 = arith.addf %22, %23 : vector<8x64xf32>
    %25 = math.tanh %24 : vector<8x64xf32>
    %26 = arith.negf %24 : vector<8x64xf32>
    %27 = math.exp %26 : vector<8x64xf32>
    %cst_20 = arith.constant 1.000000e+00 : f32
    %28 = vector.broadcast %cst_20 : f32 to vector<8x64xf32>
    %29 = arith.addf %28, %27 : vector<8x64xf32>
    %30 = arith.divf %28, %29 : vector<8x64xf32>
    %31 = arith.select %20, %25, %30 : vector<8x64xi1>, vector<8x64xf32>
    %32 = vector.extract_strided_slice %31 {offsets = [0, 0], sizes = [8, 16], strides = [1, 1]} : vector<8x64xf32> to vector<8x16xf32>
    %33 = vector.extract_strided_slice %31 {offsets = [0, 16], sizes = [8, 16], strides = [1, 1]} : vector<8x64xf32> to vector<8x16xf32>
    %34 = vector.extract_strided_slice %31 {offsets = [0, 32], sizes = [8, 16], strides = [1, 1]} : vector<8x64xf32> to vector<8x16xf32>
    %35 = vector.extract_strided_slice %31 {offsets = [0, 48], sizes = [8, 16], strides = [1, 1]} : vector<8x64xf32> to vector<8x16xf32>
    %36 = arith.mulf %33, %14 : vector<8x16xf32>
    %37 = arith.mulf %32, %34 : vector<8x16xf32>
    %38 = arith.addf %36, %37 : vector<8x16xf32>
    %39 = math.tanh %38 : vector<8x16xf32>
    %40 = arith.mulf %35, %39 : vector<8x16xf32>
    %c0_21 = arith.constant 0 : index
    %c0_22 = arith.constant 0 : index
    %c0_23 = arith.constant 0 : index
    %41 = vector.load %arg14[%c0_21, %c0_22, %c0_23] : memref<4x8x16xf32, #tpu.memory_space<vmem>>, vector<1x8x16xf32>
    %42 = vector.shape_cast %41 : vector<1x8x16xf32> to vector<8x16xf32>
    %43 = vector.shape_cast %40 : vector<8x16xf32> to vector<1x8x16xf32>
    tpu.vector_store %arg14[%c0_21, %c0_22, %c0_23], %43 {strides = array<i32>} : memref<4x8x16xf32, #tpu.memory_space<vmem>>, vector<1x8x16xf32>,
    %c1 = arith.constant 1 : index
    %c0_24 = arith.constant 0 : index
    %c0_25 = arith.constant 0 : index
    %44 = vector.load %arg13[%c1, %c0_24, %c0_25] : memref<4x8x64xf32, #tpu.memory_space<vmem>>, vector<1x8x64xf32>
    %45 = vector.shape_cast %44 : vector<1x8x64xf32> to vector<8x64xf32>
    %cst_26 = arith.constant dense<0.000000e+00> : vector<8x64xf32>
    %46 = tpu.matmul %40, %12, %cst_26 {dimension_numbers = #tpu.dot_dimension_numbers<[1], [0], [0], [1], [0, 0, 1, 1], [], []>} : vector<8x16xf32>, vector<16x64xf32>, vector<8x64xf32> -> vector<8x64xf32>
    %47 = arith.addf %45, %46 : vector<8x64xf32>
    %48 = math.tanh %47 : vector<8x64xf32>
    %49 = arith.negf %47 : vector<8x64xf32>
    %50 = math.exp %49 : vector<8x64xf32>
    %cst_27 = arith.constant 1.000000e+00 : f32
    %51 = vector.broadcast %cst_27 : f32 to vector<8x64xf32>
    %52 = arith.addf %51, %50 : vector<8x64xf32>
    %53 = arith.divf %51, %52 : vector<8x64xf32>
    %54 = arith.select %20, %48, %53 : vector<8x64xi1>, vector<8x64xf32>
    %55 = vector.extract_strided_slice %54 {offsets = [0, 0], sizes = [8, 16], strides = [1, 1]} : vector<8x64xf32> to vector<8x16xf32>
    %56 = vector.extract_strided_slice %54 {offsets = [0, 16], sizes = [8, 16], strides = [1, 1]} : vector<8x64xf32> to vector<8x16xf32>
    %57 = vector.extract_strided_slice %54 {offsets = [0, 32], sizes = [8, 16], strides = [1, 1]} : vector<8x64xf32> to vector<8x16xf32>
    %58 = vector.extract_strided_slice %54 {offsets = [0, 48], sizes = [8, 16], strides = [1, 1]} : vector<8x64xf32> to vector<8x16xf32>
    %59 = arith.mulf %56, %38 : vector<8x16xf32>
    %60 = arith.mulf %55, %57 : vector<8x16xf32>
    %61 = arith.addf %59, %60 : vector<8x16xf32>
    %62 = math.tanh %61 : vector<8x16xf32>
    %63 = arith.mulf %58, %62 : vector<8x16xf32>
    %c1_28 = arith.constant 1 : index
    %c0_29 = arith.constant 0 : index
    %c0_30 = arith.constant 0 : index
    %64 = vector.load %arg14[%c1_28, %c0_29, %c0_30] : memref<4x8x16xf32, #tpu.memory_space<vmem>>, vector<1x8x16xf32>
    %65 = vector.shape_cast %64 : vector<1x8x16xf32> to vector<8x16xf32>
    %66 = vector.shape_cast %63 : vector<8x16xf32> to vector<1x8x16xf32>
    tpu.vector_store %arg14[%c1_28, %c0_29, %c0_30], %66 {strides = array<i32>} : memref<4x8x16xf32, #tpu.memory_space<vmem>>, vector<1x8x16xf32>,
    %c2 = arith.constant 2 : index
    %c0_31 = arith.constant 0 : index
    %c0_32 = arith.constant 0 : index
    %67 = vector.load %arg13[%c2, %c0_31, %c0_32] : memref<4x8x64xf32, #tpu.memory_space<vmem>>, vector<1x8x64xf32>
    %68 = vector.shape_cast %67 : vector<1x8x64xf32> to vector<8x64xf32>
    %cst_33 = arith.constant dense<0.000000e+00> : vector<8x64xf32>
    %69 = tpu.matmul %63, %12, %cst_33 {dimension_numbers = #tpu.dot_dimension_numbers<[1], [0], [0], [1], [0, 0, 1, 1], [], []>} : vector<8x16xf32>, vector<16x64xf32>, vector<8x64xf32> -> vector<8x64xf32>
    %70 = arith.addf %68, %69 : vector<8x64xf32>
    %71 = math.tanh %70 : vector<8x64xf32>
    %72 = arith.negf %70 : vector<8x64xf32>
    %73 = math.exp %72 : vector<8x64xf32>
    %cst_34 = arith.constant 1.000000e+00 : f32
    %74 = vector.broadcast %cst_34 : f32 to vector<8x64xf32>
    %75 = arith.addf %74, %73 : vector<8x64xf32>
    %76 = arith.divf %74, %75 : vector<8x64xf32>
    %77 = arith.select %20, %71, %76 : vector<8x64xi1>, vector<8x64xf32>
    %78 = vector.extract_strided_slice %77 {offsets = [0, 0], sizes = [8, 16], strides = [1, 1]} : vector<8x64xf32> to vector<8x16xf32>
    %79 = vector.extract_strided_slice %77 {offsets = [0, 16], sizes = [8, 16], strides = [1, 1]} : vector<8x64xf32> to vector<8x16xf32>
    %80 = vector.extract_strided_slice %77 {offsets = [0, 32], sizes = [8, 16], strides = [1, 1]} : vector<8x64xf32> to vector<8x16xf32>
    %81 = vector.extract_strided_slice %77 {offsets = [0, 48], sizes = [8, 16], strides = [1, 1]} : vector<8x64xf32> to vector<8x16xf32>
    %82 = arith.mulf %79, %61 : vector<8x16xf32>
    %83 = arith.mulf %78, %80 : vector<8x16xf32>
    %84 = arith.addf %82, %83 : vector<8x16xf32>
    %85 = math.tanh %84 : vector<8x16xf32>
    %86 = arith.mulf %81, %85 : vector<8x16xf32>
    %c2_35 = arith.constant 2 : index
    %c0_36 = arith.constant 0 : index
    %c0_37 = arith.constant 0 : index
    %87 = vector.load %arg14[%c2_35, %c0_36, %c0_37] : memref<4x8x16xf32, #tpu.memory_space<vmem>>, vector<1x8x16xf32>
    %88 = vector.shape_cast %87 : vector<1x8x16xf32> to vector<8x16xf32>
    %89 = vector.shape_cast %86 : vector<8x16xf32> to vector<1x8x16xf32>
    tpu.vector_store %arg14[%c2_35, %c0_36, %c0_37], %89 {strides = array<i32>} : memref<4x8x16xf32, #tpu.memory_space<vmem>>, vector<1x8x16xf32>,
    %c3 = arith.constant 3 : index
    %c0_38 = arith.constant 0 : index
    %c0_39 = arith.constant 0 : index
    %90 = vector.load %arg13[%c3, %c0_38, %c0_39] : memref<4x8x64xf32, #tpu.memory_space<vmem>>, vector<1x8x64xf32>
    %91 = vector.shape_cast %90 : vector<1x8x64xf32> to vector<8x64xf32>
    %cst_40 = arith.constant dense<0.000000e+00> : vector<8x64xf32>
    %92 = tpu.matmul %86, %12, %cst_40 {dimension_numbers = #tpu.dot_dimension_numbers<[1], [0], [0], [1], [0, 0, 1, 1], [], []>} : vector<8x16xf32>, vector<16x64xf32>, vector<8x64xf32> -> vector<8x64xf32>
    %93 = arith.addf %91, %92 : vector<8x64xf32>
    %94 = math.tanh %93 : vector<8x64xf32>
    %95 = arith.negf %93 : vector<8x64xf32>
    %96 = math.exp %95 : vector<8x64xf32>
    %cst_41 = arith.constant 1.000000e+00 : f32
    %97 = vector.broadcast %cst_41 : f32 to vector<8x64xf32>
    %98 = arith.addf %97, %96 : vector<8x64xf32>
    %99 = arith.divf %97, %98 : vector<8x64xf32>
    %100 = arith.select %20, %94, %99 : vector<8x64xi1>, vector<8x64xf32>
    %101 = vector.extract_strided_slice %100 {offsets = [0, 0], sizes = [8, 16], strides = [1, 1]} : vector<8x64xf32> to vector<8x16xf32>
    %102 = vector.extract_strided_slice %100 {offsets = [0, 16], sizes = [8, 16], strides = [1, 1]} : vector<8x64xf32> to vector<8x16xf32>
    %103 = vector.extract_strided_slice %100 {offsets = [0, 32], sizes = [8, 16], strides = [1, 1]} : vector<8x64xf32> to vector<8x16xf32>
    %104 = vector.extract_strided_slice %100 {offsets = [0, 48], sizes = [8, 16], strides = [1, 1]} : vector<8x64xf32> to vector<8x16xf32>
    %105 = arith.mulf %102, %84 : vector<8x16xf32>
    %106 = arith.mulf %101, %103 : vector<8x16xf32>
    %107 = arith.addf %105, %106 : vector<8x16xf32>
    %108 = math.tanh %107 : vector<8x16xf32>
    %109 = arith.mulf %104, %108 : vector<8x16xf32>
    %c3_42 = arith.constant 3 : index
    %c0_43 = arith.constant 0 : index
    %c0_44 = arith.constant 0 : index
    %110 = vector.load %arg14[%c3_42, %c0_43, %c0_44] : memref<4x8x16xf32, #tpu.memory_space<vmem>>, vector<1x8x16xf32>
    %111 = vector.shape_cast %110 : vector<1x8x16xf32> to vector<8x16xf32>
    %112 = vector.shape_cast %109 : vector<8x16xf32> to vector<1x8x16xf32>
    tpu.vector_store %arg14[%c3_42, %c0_43, %c0_44], %112 {strides = array<i32>} : memref<4x8x16xf32, #tpu.memory_space<vmem>>, vector<1x8x16xf32>,
    %c0_45 = arith.constant 0 : index
    %c0_46 = arith.constant 0 : index
    %113 = vector.load %arg11[%c0_45, %c0_46] : memref<8x16xf32, #tpu.memory_space<vmem>>, vector<8x16xf32>
    tpu.vector_store %arg11[%c0_45, %c0_46], %109 {strides = array<i32>} : memref<8x16xf32, #tpu.memory_space<vmem>>, vector<8x16xf32>,
    %c0_47 = arith.constant 0 : index
    %c0_48 = arith.constant 0 : index
    %114 = vector.load %arg12[%c0_47, %c0_48] : memref<8x16xf32, #tpu.memory_space<vmem>>, vector<8x16xf32>
    tpu.vector_store %arg12[%c0_47, %c0_48], %107 {strides = array<i32>} : memref<8x16xf32, #tpu.memory_space<vmem>>, vector<8x16xf32>,
    %c0_49 = arith.constant 0 : index
    %c0_50 = arith.constant 0 : index
    %c0_51 = arith.constant 0 : index
    %115 = vector.load %arg14[%c0_49, %c0_50, %c0_51] : memref<4x8x16xf32, #tpu.memory_space<vmem>>, vector<4x8x16xf32>
    %116 = vector.shape_cast %115 : vector<4x8x16xf32> to vector<32x16xf32>
    %c0_52 = arith.constant 0 : index
    %c0_53 = arith.constant 0 : index
    %c0_54 = arith.constant 0 : index
    %117 = vector.load %arg3[%c0_52, %c0_53, %c0_54] : memref<4x8x2xf32, #tpu.memory_space<vmem>>, vector<4x8x2xf32>
    %118 = vector.shape_cast %117 : vector<4x8x2xf32> to vector<32x2xf32>
    %c0_55 = arith.constant 0 : index
    %c0_56 = arith.constant 0 : index
    %119 = vector.load %arg7[%c0_55, %c0_56] : memref<16x128xf32, #tpu.memory_space<vmem>>, vector<16x128xf32>
    %cst_57 = arith.constant dense<0.000000e+00> : vector<32x128xf32>
    %120 = tpu.matmul %116, %119, %cst_57 {dimension_numbers = #tpu.dot_dimension_numbers<[1], [0], [0], [1], [0, 0, 1, 1], [], []>} : vector<32x16xf32>, vector<16x128xf32>, vector<32x128xf32> -> vector<32x128xf32>
    %c0_58 = arith.constant 0 : index
    %c0_59 = arith.constant 0 : index
    %121 = vector.load %arg8[%c0_58, %c0_59] : memref<1x128xf32, #tpu.memory_space<vmem>>, vector<1x128xf32>
    %122 = vector.broadcast %121 : vector<1x128xf32> to vector<32x128xf32>
    %123 = arith.addf %120, %122 : vector<32x128xf32>
    %124 = vector.extract_strided_slice %123 {offsets = [0, 0], sizes = [32, 2], strides = [1, 1]} : vector<32x128xf32> to vector<32x2xf32>
    %125 = vector.extract_strided_slice %123 {offsets = [0, 2], sizes = [32, 2], strides = [1, 1]} : vector<32x128xf32> to vector<32x2xf32>
    %cst_60 = arith.constant 5.000000e-01 : f32
    %126 = vector.broadcast %cst_60 : f32 to vector<32x2xf32>
    %127 = arith.mulf %126, %125 : vector<32x2xf32>
    %128 = math.exp %127 : vector<32x2xf32>
    %129 = arith.mulf %118, %128 : vector<32x2xf32>
    %130 = arith.addf %124, %129 : vector<32x2xf32>
    %c0_61 = arith.constant 0 : index
    %c0_62 = arith.constant 0 : index
    %131 = vector.load %arg9[%c0_61, %c0_62] : memref<2x128xf32, #tpu.memory_space<vmem>>, vector<2x128xf32>
    %cst_63 = arith.constant dense<0.000000e+00> : vector<32x128xf32>
    %132 = tpu.matmul %130, %131, %cst_63 {dimension_numbers = #tpu.dot_dimension_numbers<[1], [0], [0], [1], [0, 0, 1, 1], [], []>} : vector<32x2xf32>, vector<2x128xf32>, vector<32x128xf32> -> vector<32x128xf32>
    %133 = arith.addf %123, %132 : vector<32x128xf32>
    %134 = vector.shape_cast %133 : vector<32x128xf32> to vector<4x8x128xf32>
    %c0_64 = arith.constant 0 : index
    %c0_65 = arith.constant 0 : index
    %c0_66 = arith.constant 0 : index
    %135 = vector.load %arg10[%c0_64, %c0_65, %c0_66] : memref<4x8x128xf32, #tpu.memory_space<vmem>>, vector<4x8x128xf32>
    tpu.vector_store %arg10[%c0_64, %c0_65, %c0_66], %134 {strides = array<i32>} : memref<4x8x128xf32, #tpu.memory_space<vmem>>, vector<4x8x128xf32>,
    return
  }
  func.func @transform_0(%arg0: i32, %arg1: i32) -> (i32, i32, i32) {
    %c0_i32 = arith.constant 0 : i32
    %c0_i32_0 = arith.constant 0 : i32
    return %arg1, %arg0, %c0_i32 : i32, i32, i32
  }
  func.func @transform_1(%arg0: i32, %arg1: i32) -> (i32, i32, i32) {
    %c0_i32 = arith.constant 0 : i32
    %c0_i32_0 = arith.constant 0 : i32
    return %arg1, %arg0, %c0_i32 : i32, i32, i32
  }
  func.func @transform_2(%arg0: i32, %arg1: i32) -> (i32, i32) {
    %c0_i32 = arith.constant 0 : i32
    %c0_i32_0 = arith.constant 0 : i32
    %c0_i32_1 = arith.constant 0 : i32
    return %c0_i32, %c0_i32_0 : i32, i32
  }
  func.func @transform_3(%arg0: i32, %arg1: i32) -> (i32, i32) {
    %c0_i32 = arith.constant 0 : i32
    %c0_i32_0 = arith.constant 0 : i32
    %c0_i32_1 = arith.constant 0 : i32
    return %c0_i32, %c0_i32_0 : i32, i32
  }
  func.func @transform_4(%arg0: i32, %arg1: i32) -> (i32, i32) {
    %c0_i32 = arith.constant 0 : i32
    %c0_i32_0 = arith.constant 0 : i32
    %c0_i32_1 = arith.constant 0 : i32
    return %c0_i32, %c0_i32_0 : i32, i32
  }
  func.func @transform_5(%arg0: i32, %arg1: i32) -> (i32, i32) {
    %c0_i32 = arith.constant 0 : i32
    %c0_i32_0 = arith.constant 0 : i32
    %c0_i32_1 = arith.constant 0 : i32
    return %c0_i32, %c0_i32_0 : i32, i32
  }
  func.func @transform_6(%arg0: i32, %arg1: i32) -> (i32, i32) {
    %c0_i32 = arith.constant 0 : i32
    %c0_i32_0 = arith.constant 0 : i32
    %c0_i32_1 = arith.constant 0 : i32
    return %c0_i32, %c0_i32_0 : i32, i32
  }
  func.func @transform_7(%arg0: i32, %arg1: i32) -> (i32, i32) {
    %c0_i32 = arith.constant 0 : i32
    %c0_i32_0 = arith.constant 0 : i32
    %c0_i32_1 = arith.constant 0 : i32
    return %c0_i32, %c0_i32_0 : i32, i32
  }
  func.func @transform_8(%arg0: i32, %arg1: i32) -> (i32, i32, i32) {
    %c0_i32 = arith.constant 0 : i32
    %c0_i32_0 = arith.constant 0 : i32
    return %arg1, %arg0, %c0_i32 : i32, i32, i32
  }
}

</mosaic_0001>

<llo_original>
// kernel: recurrent_vae_forward.1
$region0: #{recurrent_vae_forward.1}
  #allocation0 [shape = 'u32[]', space=smem, size = 0x4, offset = 0x4, fixed_abs, tag = 'smem constant byte address 0x4 - core index']
  #allocation1 [shape = 'u32[144,128]{1,0:T(1,128)}', space=vmem, size = 0x12000, scoped, tag = 'internal scratch']
  #allocation2 [shape = 'f32[8,16]{1,0:T(8,128)}', space=vmem, size = 0x1000, scoped, tag = 'scratch operand']
  #allocation3 [shape = 'f32[8,16]{1,0:T(8,128)}', space=vmem, size = 0x1000, scoped, tag = 'scratch operand']
  #allocation4 [shape = 'f32[4,8,64]{2,1,0:T(8,128)}', space=vmem, size = 0x4000, scoped, tag = 'scratch operand']
  #allocation5 [shape = 'f32[4,8,16]{2,1,0:T(8,128)}', space=vmem, size = 0x4000, scoped, tag = 'scratch operand']
  %s0 = inlined_call_operand.vmem [shape: f32[8,8,2], index: 0, kind: input, shape index: {}]
  %s1 = inlined_call_operand.vmem [shape: f32[8,8,2], index: 1, kind: input, shape index: {}]
  %s2 = inlined_call_operand.vmem [shape: f32[2,64], index: 2, kind: input, shape index: {}]
  %s3 = inlined_call_operand.vmem [shape: f32[16,64], index: 3, kind: input, shape index: {}]
  %s4 = inlined_call_operand.vmem [shape: f32[1,64], index: 4, kind: input, shape index: {}]
  %s5 = inlined_call_operand.vmem [shape: f32[16,128], index: 5, kind: input, shape index: {}]
  %s6 = inlined_call_operand.vmem [shape: f32[1,128], index: 6, kind: input, shape index: {}]
  %s7 = inlined_call_operand.vmem [shape: f32[2,128], index: 7, kind: input, shape index: {}]
  %s8 = inlined_call_operand.vmem [shape: f32[8,8,128], index: 8, kind: output, shape index: {}]
  %s9 = sld [smem:[#allocation0]]
  $region69: #{recurrent_vae_forward.1} parent=0
    _
  %s11 = ssub.s32 1, %s9
  %s12 = scalar_select 0, %s11, %s9
  loop: start=0, step=1, limit=4
  $region2: #{recurrent_vae_forward.1} parent=0 // loop_pre_header
    _
  $region3: #{recurrent_vae_forward.1} parent=0 // loop_header
    %s14 = sphi 0, %s18
    %p15 = scmp.ge.s32.totalorder %s14, 4
    %s21 = sphi 0, %s33
    %s22 = sphi 0, %s29
    %s23 = sphi 0, %s21
    %s24 = sphi 0, %s22
    %s25 = sphi 0, %s23
    %s26 = sphi 0, %s24
    %s38 = sphi 0, %s40
    %s41 = sphi 0, %s38
    %s42 = sphi 0, %s41
    %s58 = sphi 0, %s42
    %s66 = sphi 0, %s68
    %s69 = sphi 0, %s66
    %s70 = sphi 0, %s69
    %s86 = sphi 0, %s70
    %s90 = sphi 0, %s90
    %s92 = sphi 0, %s90
    %s93 = sphi 0, %s92
    %s107 = sphi 0, %s93
    %s111 = sphi 0, %s111
    %s113 = sphi 0, %s111
    %s114 = sphi 0, %s113
    %s128 = sphi 0, %s114
    %s132 = sphi 0, %s132
    %s134 = sphi 0, %s132
    %s135 = sphi 0, %s134
    %s149 = sphi 0, %s135
    %s153 = sphi 0, %s153
    %s155 = sphi 0, %s153
    %s156 = sphi 0, %s155
    %s170 = sphi 0, %s156
    %s174 = sphi 0, %s174
    %s176 = sphi 0, %s174
    %s177 = sphi 0, %s176
    %s191 = sphi 0, %s177
    %s195 = sphi 0, %s195
    %s197 = sphi 0, %s195
    %s198 = sphi 0, %s197
    %s212 = sphi 0, %s198
    %s220 = sphi 0, %s222
    %s223 = sphi 0, %s220
    %s224 = sphi 0, %s223
    %s240 = sphi 0, %s224
  $region4: #{recurrent_vae_forward.1} parent=0 // loop_header_branch
    %17 = sbr.rel (%p15) target = $region8
  $region5: #{recurrent_vae_forward.1} parent=0 // loop_body
    %s19 = ssub.s32 %s14, 1
    %s20 = ssub.s32 %s14, 2
    %s27 = sadd.s32 1, %s22
    %p28 = scmp.ge.s32.totalorder %s27, 2
    %s29 = scalar_select %p28, 0, %s27
    %s30 = sadd.s32 1, %s21
    %s31 = scalar_select %p28, %s30, %s21
    %p32 = scmp.ge.s32.totalorder %s31, 1
    %s33 = scalar_select %p32, 0, %s31
    %s34 = ssub.s32 %s22, %s29
    %s35 = ssub.s32 %s21, %s33
    %s36 = sor.u32 %s34, %s35
    %p37 = scmp.eq.s32.totalorder %s36, 0
    %s39 = sadd.s32 %s38, 1
    %s40 = scalar_select %p37, %s38, %s39
    %p43 = pneg %p37
    %p44 = scmp.eq.s32.totalorder %s14, 1
    %p45 = por %p43, %p44
    %p46 = scmp.ne.s32.totalorder %s38, %s41
    %p47 = scmp.eq.s32.totalorder %s14, 0
    %p48 = por %p46, %p47
    %p49 = scmp.ne.s32.totalorder %s38, %s41
    %p50 = scmp.eq.s32.totalorder %s19, 1
    %p51 = por %p49, %p50
    %p52 = scmp.ne.s32.totalorder %s41, %s42
    %p53 = scmp.eq.s32.totalorder %s19, 0
    %p54 = por %p52, %p53
    %p55 = scmp.ne.s32.totalorder %s41, %s42
    %p56 = scmp.eq.s32.totalorder %s20, 1
    %p57 = por %p55, %p56
    %p59 = scmp.ne.s32.totalorder %s42, %s58
    %p60 = scmp.eq.s32.totalorder %s20, 0
    %p61 = por %p59, %p60
    %s62 = ssub.s32 %s22, %s29
    %s63 = ssub.s32 %s21, %s33
    %s64 = sor.u32 %s62, %s63
    %p65 = scmp.eq.s32.totalorder %s64, 0
    %s67 = sadd.s32 %s66, 1
    %s68 = scalar_select %p65, %s66, %s67
    %p71 = pneg %p65
    %p72 = scmp.eq.s32.totalorder %s14, 1
    %p73 = por %p71, %p72
    %p74 = scmp.ne.s32.totalorder %s66, %s69
    %p75 = scmp.eq.s32.totalorder %s14, 0
    %p76 = por %p74, %p75
    %p77 = scmp.ne.s32.totalorder %s66, %s69
    %p78 = scmp.eq.s32.totalorder %s19, 1
    %p79 = por %p77, %p78
    %p80 = scmp.ne.s32.totalorder %s69, %s70
    %p81 = scmp.eq.s32.totalorder %s19, 0
    %p82 = por %p80, %p81
    %p83 = scmp.ne.s32.totalorder %s69, %s70
    %p84 = scmp.eq.s32.totalorder %s20, 1
    %p85 = por %p83, %p84
    %p87 = scmp.ne.s32.totalorder %s70, %s86
    %p88 = scmp.eq.s32.totalorder %s20, 0
    %p89 = por %p87, %p88
    %s91 = sadd.s32 %s90, 1
    %p94 = scmp.eq.s32.totalorder %s14, 1
    %p95 = scmp.ne.s32.totalorder %s90, %s92
    %p96 = scmp.eq.s32.totalorder %s14, 0
    %p97 = por %p95, %p96
    %p98 = scmp.ne.s32.totalorder %s90, %s92
    %p99 = scmp.eq.s32.totalorder %s19, 1
    %p100 = por %p98, %p99
    %p101 = scmp.ne.s32.totalorder %s92, %s93
    %p102 = scmp.eq.s32.totalorder %s19, 0
    %p103 = por %p101, %p102
    %p104 = scmp.ne.s32.totalorder %s92, %s93
    %p105 = scmp.eq.s32.totalorder %s20, 1
    %p106 = por %p104, %p105
    %p108 = scmp.ne.s32.totalorder %s93, %s107
    %p109 = scmp.eq.s32.totalorder %s20, 0
    %p110 = por %p108, %p109
    %s112 = sadd.s32 %s111, 1
    %p115 = scmp.eq.s32.totalorder %s14, 1
    %p116 = scmp.ne.s32.totalorder %s111, %s113
    %p117 = scmp.eq.s32.totalorder %s14, 0
    %p118 = por %p116, %p117
    %p119 = scmp.ne.s32.totalorder %s111, %s113
    %p120 = scmp.eq.s32.totalorder %s19, 1
    %p121 = por %p119, %p120
    %p122 = scmp.ne.s32.totalorder %s113, %s114
    %p123 = scmp.eq.s32.totalorder %s19, 0
    %p124 = por %p122, %p123
    %p125 = scmp.ne.s32.totalorder %s113, %s114
    %p126 = scmp.eq.s32.totalorder %s20, 1
    %p127 = por %p125, %p126
    %p129 = scmp.ne.s32.totalorder %s114, %s128
    %p130 = scmp.eq.s32.totalorder %s20, 0
    %p131 = por %p129, %p130
    %s133 = sadd.s32 %s132, 1
    %p136 = scmp.eq.s32.totalorder %s14, 1
    %p137 = scmp.ne.s32.totalorder %s132, %s134
    %p138 = scmp.eq.s32.totalorder %s14, 0
    %p139 = por %p137, %p138
    %p140 = scmp.ne.s32.totalorder %s132, %s134
    %p141 = scmp.eq.s32.totalorder %s19, 1
    %p142 = por %p140, %p141
    %p143 = scmp.ne.s32.totalorder %s134, %s135
    %p144 = scmp.eq.s32.totalorder %s19, 0
    %p145 = por %p143, %p144
    %p146 = scmp.ne.s32.totalorder %s134, %s135
    %p147 = scmp.eq.s32.totalorder %s20, 1
    %p148 = por %p146, %p147
    %p150 = scmp.ne.s32.totalorder %s135, %s149
    %p151 = scmp.eq.s32.totalorder %s20, 0
    %p152 = por %p150, %p151
    %s154 = sadd.s32 %s153, 1
    %p157 = scmp.eq.s32.totalorder %s14, 1
    %p158 = scmp.ne.s32.totalorder %s153, %s155
    %p159 = scmp.eq.s32.totalorder %s14, 0
    %p160 = por %p158, %p159
    %p161 = scmp.ne.s32.totalorder %s153, %s155
    %p162 = scmp.eq.s32.totalorder %s19, 1
    %p163 = por %p161, %p162
    %p164 = scmp.ne.s32.totalorder %s155, %s156
    %p165 = scmp.eq.s32.totalorder %s19, 0
    %p166 = por %p164, %p165
    %p167 = scmp.ne.s32.totalorder %s155, %s156
    %p168 = scmp.eq.s32.totalorder %s20, 1
    %p169 = por %p167, %p168
    %p171 = scmp.ne.s32.totalorder %s156, %s170
    %p172 = scmp.eq.s32.totalorder %s20, 0
    %p173 = por %p171, %p172
    %s175 = sadd.s32 %s174, 1
    %p178 = scmp.eq.s32.totalorder %s14, 1
    %p179 = scmp.ne.s32.totalorder %s174, %s176
    %p180 = scmp.eq.s32.totalorder %s14, 0
    %p181 = por %p179, %p180
    %p182 = scmp.ne.s32.totalorder %s174, %s176
    %p183 = scmp.eq.s32.totalorder %s19, 1
    %p184 = por %p182, %p183
    %p185 = scmp.ne.s32.totalorder %s176, %s177
    %p186 = scmp.eq.s32.totalorder %s19, 0
    %p187 = por %p185, %p186
    %p188 = scmp.ne.s32.totalorder %s176, %s177
    %p189 = scmp.eq.s32.totalorder %s20, 1
    %p190 = por %p188, %p189
    %p192 = scmp.ne.s32.totalorder %s177, %s191
    %p193 = scmp.eq.s32.totalorder %s20, 0
    %p194 = por %p192, %p193
    %s196 = sadd.s32 %s195, 1
    %p199 = scmp.eq.s32.totalorder %s14, 1
    %p200 = scmp.ne.s32.totalorder %s195, %s197
    %p201 = scmp.eq.s32.totalorder %s14, 0
    %p202 = por %p200, %p201
    %p203 = scmp.ne.s32.totalorder %s195, %s197
    %p204 = scmp.eq.s32.totalorder %s19, 1
    %p205 = por %p203, %p204
    %p206 = scmp.ne.s32.totalorder %s197, %s198
    %p207 = scmp.eq.s32.totalorder %s19, 0
    %p208 = por %p206, %p207
    %p209 = scmp.ne.s32.totalorder %s197, %s198
    %p210 = scmp.eq.s32.totalorder %s20, 1
    %p211 = por %p209, %p210
    %p213 = scmp.ne.s32.totalorder %s198, %s212
    %p214 = scmp.eq.s32.totalorder %s20, 0
    %p215 = por %p213, %p214
    %s216 = ssub.s32 %s22, %s29
    %s217 = ssub.s32 %s21, %s33
    %s218 = sor.u32 %s216, %s217
    %p219 = scmp.eq.s32.totalorder %s218, 0
    %s221 = sadd.s32 %s220, 1
    %s222 = scalar_select %p219, %s220, %s221
    %p225 = pneg %p219
    %p226 = scmp.eq.s32.totalorder %s14, 1
    %p227 = por %p225, %p226
    %p228 = scmp.ne.s32.totalorder %s220, %s223
    %p229 = scmp.eq.s32.totalorder %s14, 0
    %p230 = por %p228, %p229
    %p231 = scmp.ne.s32.totalorder %s220, %s223
    %p232 = scmp.eq.s32.totalorder %s19, 1
    %p233 = por %p231, %p232
    %p234 = scmp.ne.s32.totalorder %s223, %s224
    %p235 = scmp.eq.s32.totalorder %s19, 0
    %p236 = por %p234, %p235
    %p237 = scmp.ne.s32.totalorder %s223, %s224
    %p238 = scmp.eq.s32.totalorder %s20, 1
    %p239 = por %p237, %p238
    %p241 = scmp.ne.s32.totalorder %s224, %s240
    %p242 = scmp.eq.s32.totalorder %s20, 0
    %p243 = por %p241, %p242
    %p244 = scmp.le.s32.totalorder 1, %s14
    %p245 = scmp.lt.s32.totalorder %s14, 3
    %p246 = pnand %p244, %p245
    %p247 = pneg %p246
    // Predicated region
    $region9: #{recurrent_vae_forward.1} parent=5 // pred_check
      _
    $region10: #{recurrent_vae_forward.1} parent=5 // pred_check_branch
      %249 = sbr.rel (%p246) target = $region12
    $region11: #{recurrent_vae_forward.1} parent=5 // pred_region
      %s250 = ssub.s32 %s14, 1
      // Predicated region
      $region13: #{recurrent_vae_forward.1} parent=11 // pred_check
        %p251 = pneg %p103
      $region14: #{recurrent_vae_forward.1} parent=11 // pred_check_branch
        %253 = sbr.rel (%p251) target = $region16
      $region15: #{recurrent_vae_forward.1} parent=11 // pred_region
        _
      $region16: #{recurrent_vae_forward.1} parent=11 // pred_fallthru
        _
      // Predicated region
      $region17: #{recurrent_vae_forward.1} parent=11 // pred_check
        %p254 = pneg %p124
      $region18: #{recurrent_vae_forward.1} parent=11 // pred_check_branch
        %256 = sbr.rel (%p254) target = $region20
      $region19: #{recurrent_vae_forward.1} parent=11 // pred_region
        _
      $region20: #{recurrent_vae_forward.1} parent=11 // pred_fallthru
        _
      // Predicated region
      $region21: #{recurrent_vae_forward.1} parent=11 // pred_check
        %p257 = pneg %p145
      $region22: #{recurrent_vae_forward.1} parent=11 // pred_check_branch
        %259 = sbr.rel (%p257) target = $region24
      $region23: #{recurrent_vae_forward.1} parent=11 // pred_region
        _
      $region24: #{recurrent_vae_forward.1} parent=11 // pred_fallthru
        _
      // Predicated region
      $region25: #{recurrent_vae_forward.1} parent=11 // pred_check
        %p260 = pneg %p166
      $region26: #{recurrent_vae_forward.1} parent=11 // pred_check_branch
        %262 = sbr.rel (%p260) target = $region28
      $region27: #{recurrent_vae_forward.1} parent=11 // pred_region
        _
      $region28: #{recurrent_vae_forward.1} parent=11 // pred_fallthru
        _
      // Predicated region
      $region29: #{recurrent_vae_forward.1} parent=11 // pred_check
        %p263 = pneg %p187
      $region30: #{recurrent_vae_forward.1} parent=11 // pred_check_branch
        %265 = sbr.rel (%p263) target = $region32
      $region31: #{recurrent_vae_forward.1} parent=11 // pred_region
        _
      $region32: #{recurrent_vae_forward.1} parent=11 // pred_fallthru
        _
      // Predicated region
      $region33: #{recurrent_vae_forward.1} parent=11 // pred_check
        %p266 = pneg %p208
      $region34: #{recurrent_vae_forward.1} parent=11 // pred_check_branch
        %268 = sbr.rel (%p266) target = $region36
      $region35: #{recurrent_vae_forward.1} parent=11 // pred_region
        _
      $region36: #{recurrent_vae_forward.1} parent=11 // pred_fallthru
        _
    $region12: #{recurrent_vae_forward.1} parent=5 // pred_fallthru
      _
    %p269 = scmp.lt.s32.totalorder %s14, 2
    // Predicated region
    $region37: #{recurrent_vae_forward.1} parent=5 // pred_check
      %p270 = pneg %p269
    $region38: #{recurrent_vae_forward.1} parent=5 // pred_check_branch
      %272 = sbr.rel (%p270) target = $region40
    $region39: #{recurrent_vae_forward.1} parent=5 // pred_region
      // Predicated region
      $region41: #{recurrent_vae_forward.1} parent=39 // pred_check
        %p273 = pneg %p48
      $region42: #{recurrent_vae_forward.1} parent=39 // pred_check_branch
        %275 = sbr.rel (%p273) target = $region44
      $region43: #{recurrent_vae_forward.1} parent=39 // pred_region
        %s276 = smul.u32 4, %s22
        %p277 = scmp.lt.s32.totalorder %s276, 7
        %s278 = scalar_select %p277, %s276, 7
        %p279 = scmp.lt.s32.totalorder %s21, 0
        %s280 = scalar_select %p279, %s21, 0
        %s281 = sadd.s32 %s280, %s278
        %s282 = smul.addr %s281, 8
        %s283 = scalar_lea.vmem %s0, %s282
        %s284 = smul.u32 4, %s22
      $region44: #{recurrent_vae_forward.1} parent=39 // pred_fallthru
        _
      // Predicated region
      $region45: #{recurrent_vae_forward.1} parent=39 // pred_check
        %p285 = pneg %p76
      $region46: #{recurrent_vae_forward.1} parent=39 // pred_check_branch
        %287 = sbr.rel (%p285) target = $region48
      $region47: #{recurrent_vae_forward.1} parent=39 // pred_region
        %s288 = smul.u32 4, %s22
        %p289 = scmp.lt.s32.totalorder %s288, 7
        %s290 = scalar_select %p289, %s288, 7
        %p291 = scmp.lt.s32.totalorder %s21, 0
        %s292 = scalar_select %p291, %s21, 0
        %s293 = sadd.s32 %s292, %s290
        %s294 = smul.addr %s293, 8
        %s295 = scalar_lea.vmem %s1, %s294
        %s296 = smul.u32 4, %s22
      $region48: #{recurrent_vae_forward.1} parent=39 // pred_fallthru
        _
    $region40: #{recurrent_vae_forward.1} parent=5 // pred_fallthru
      _
    %p297 = scmp.le.s32.totalorder 1, %s14
    %p298 = scmp.lt.s32.totalorder %s14, 3
    %p299 = pnand %p297, %p298
    %p300 = pneg %p299
    // Predicated region
    $region49: #{recurrent_vae_forward.1} parent=5 // pred_check
      _
    $region50: #{recurrent_vae_forward.1} parent=5 // pred_check_branch
      %302 = sbr.rel (%p299) target = $region52
    $region51: #{recurrent_vae_forward.1} parent=5 // pred_region
      %s303 = ssub.s32 %s14, 1
      %s304 = smul.u32 4, %s24
      %p305 = scmp.lt.s32.totalorder %s304, 7
      %s306 = scalar_select %p305, %s304, 7
      %p307 = scmp.lt.s32.totalorder %s23, 0
      %s308 = scalar_select %p307, %s23, 0
      %s309 = sadd.s32 %s308, %s306
      %s310 = smul.addr %s309, 8
      %s311 = scalar_lea.vmem %s0, %s310
      %p312 = pneg %p54
      %p313 = pneg %p51
      %s314 = smul.u32 4, %s24
      %p315 = scmp.lt.s32.totalorder %s314, 7
      %s316 = scalar_select %p315, %s314, 7
      %p317 = scmp.lt.s32.totalorder %s23, 0
      %s318 = scalar_select %p317, %s23, 0
      %s319 = sadd.s32 %s318, %s316
      %s320 = smul.addr %s319, 8
      %s321 = scalar_lea.vmem %s1, %s320
      %p322 = pneg %p82
      %p323 = pneg %p79
      %p324 = pneg %p103
      %p325 = pneg %p100
      %p326 = pneg %p124
      %p327 = pneg %p121
      %p328 = pneg %p145
      %p329 = pneg %p142
      %p330 = pneg %p166
      %p331 = pneg %p163
      %p332 = pneg %p187
      %p333 = pneg %p184
      %p334 = pneg %p208
      %p335 = pneg %p205
      %p336 = pneg %p236
      %p337 = pneg %p233
      %s338 = smul.u32 4, %s24
      %p339 = scmp.lt.s32.totalorder %s338, 7
      %s340 = scalar_select %p339, %s338, 7
      %p341 = scmp.lt.s32.totalorder %s23, 0
      %s342 = scalar_select %p341, %s23, 0
      %s343 = sadd.s32 %s342, %s340
      %s344 = smul.addr %s343, 8
      %s345 = scalar_lea.vmem %s8, %s344
      %s346 = smul.u32 4, %s24
      %p347 = scmp.lt.s32.totalorder %s346, 7
      %s348 = scalar_select %p347, %s346, 7
      %p349 = scmp.lt.s32.totalorder %s23, 0
      %s350 = scalar_select %p349, %s23, 0
      %s351 = sadd.s32 %s350, %s348
      %s352 = smul.addr %s351, 8
      %s353 = scalar_lea.vmem %s0, %s352
      %s354 = smul.u32 4, %s24
      %s355 = smul.u32 4, %s24
      %p356 = scmp.lt.s32.totalorder %s355, 7
      %s357 = scalar_select %p356, %s355, 7
      %p358 = scmp.lt.s32.totalorder %s23, 0
      %s359 = scalar_select %p358, %s23, 0
      %s360 = sadd.s32 %s359, %s357
      %s361 = smul.addr %s360, 8
      %s362 = scalar_lea.vmem %s1, %s361
      %s363 = smul.u32 4, %s24
      %s364 = smul.u32 4, %s24
      %p365 = scmp.lt.s32.totalorder %s364, 7
      %s366 = scalar_select %p365, %s364, 7
      %p367 = scmp.lt.s32.totalorder %s23, 0
      %s368 = scalar_select %p367, %s23, 0
      %s369 = sadd.s32 %s368, %s366
      %s370 = smul.addr %s369, 8
      %s371 = scalar_lea.vmem %s8, %s370
      %s372 = smul.u32 4, %s24
      %p373 = scmp.eq.s32.totalorder %s24, 0
      // Predicated region
      $region53: #{recurrent_vae_forward.1} parent=51 // pred_check
        %p374 = pneg %p373
      $region54: #{recurrent_vae_forward.1} parent=51 // pred_check_branch
        %376 = sbr.rel (%p374) target = $region56
      $region55: #{recurrent_vae_forward.1} parent=51 // pred_region
        %vm377 = vcmask 130048
        %378 = vst.msk [vmem:[#allocation2] sm:$0xff] %vm377, 0.0
        %379 = vst.msk [vmem:[#allocation3] sm:$0xff] %vm377, 0.0
      $region56: #{recurrent_vae_forward.1} parent=51 // pred_fallthru
        _
      %v380 = vld [vmem:[%s353] sm:$0xff]
      %v381 = vld [vmem:[%s353 + $0x8] sm:$0xff]
      %v382 = vld [vmem:[%s353 + $0x10] sm:$0xff]
      %v383 = vld [vmem:[%s353 + $0x18] sm:$0xff]
      %v384 = vld [vmem:[%s2] sm:$0x3]
      %v385 = vld [vmem:[%s4] sm:$0x1]
      %v387 = vlaneseq
      %v388 = vshrl.u32 %v387, 7
      %v389 = vsub.s32 0, %v388
      %v390 = vrot.slane %v385, %v389
      %vm392 = vcmask 15360
      %v394 = vsel %vm392, %v380, 0
      %v397 = vsel %vm392, %v381, 0
      %v400 = vsel %vm392, %v382, 0
      %v403 = vsel %vm392, %v383, 0
      %vm405 = vcmask 1041408
      %v407 = vsel %vm405, %v384, 0
      %409 = vmatprep.subr.mxu0 0.0
      %410 = vmatpush1.msra.mxu0 0.0
      %411 = vmatprep.subr.mxu0 0.0
      %412 = vmatpush1.msra.mxu0 0.0
      %413 = vmatprep.subr.mxu0 0.0
      %414 = vmatpush1.msra.mxu0 0.0
      %415 = vmatprep.subr.mxu0 0.0
      %416 = vmatpush1.msra.mxu0 0.0
      %417 = vmatprep.subr.mxu0 0.0
      %418 = vmatpush1.msra.mxu0 0.0
      %419 = vmatprep.subr.mxu0 0.0
      %420 = vmatpush1.msra.mxu0 0.0
      %421 = vmatprep.subr.mxu0 0.0
      %422 = vmatpush1.msra.mxu0 0.0
      %423 = vmatprep.subr.mxu0 0.0
      %424 = vmatpush1.msra.mxu0 0.0
      %425 = vmatprep.subr.mxu0 0.0
      %426 = vmatpush1.msra.mxu0 0.0
      %427 = vmatprep.subr.mxu0 0.0
      %428 = vmatpush1.msra.mxu0 0.0
      %429 = vmatprep.subr.mxu0 0.0
      %430 = vmatpush1.msra.mxu0 0.0
      %431 = vmatprep.subr.mxu0 0.0
      %432 = vmatpush1.msra.mxu0 0.0
      %433 = vmatprep.subr.mxu0 0.0
      %434 = vmatpush1.msra.mxu0 0.0
      %435 = vmatprep.subr.mxu0 0.0
      %436 = vmatpush1.msra.mxu0 0.0
      %437 = vmatprep.subr.mxu0 0.0
      %438 = vmatpush1.msra.mxu0 0.0
      %439 = vmatprep.subr.mxu0 0.0
      %440 = vmatpush1.msra.mxu0 %v407
      %441 = vmatprep.subr.mxu0 0.0
      %442 = vmatpush2.msra.mxu0 0.0
      %443 = vmatprep.subr.mxu0 0.0
      %444 = vmatpush2.msra.mxu0 0.0
      %445 = vmatprep.subr.mxu0 0.0
      %446 = vmatpush2.msra.mxu0 0.0
      %447 = vmatprep.subr.mxu0 0.0
      %448 = vmatpush2.msra.mxu0 0.0
      %449 = vmatprep.subr.mxu0 0.0
      %450 = vmatpush2.msra.mxu0 0.0
      %451 = vmatprep.subr.mxu0 0.0
      %452 = vmatpush2.msra.mxu0 0.0
      %453 = vmatprep.subr.mxu0 0.0
      %454 = vmatpush2.msra.mxu0 0.0
      %455 = vmatprep.subr.mxu0 0.0
      %456 = vmatpush2.msra.mxu0 0.0
      %457 = vmatprep.subr.mxu0 0.0
      %458 = vmatpush2.msra.mxu0 0.0
      %459 = vmatprep.subr.mxu0 0.0
      %460 = vmatpush2.msra.mxu0 0.0
      %461 = vmatprep.subr.mxu0 0.0
      %462 = vmatpush2.msra.mxu0 0.0
      %463 = vmatprep.subr.mxu0 0.0
      %464 = vmatpush2.msra.mxu0 0.0
      %465 = vmatprep.subr.mxu0 0.0
      %466 = vmatpush2.msra.mxu0 0.0
      %467 = vmatprep.subr.mxu0 0.0
      %468 = vmatpush2.msra.mxu0 0.0
      %469 = vmatprep.subr.mxu0 0.0
      %470 = vmatpush2.msra.mxu0 0.0
      %471 = vmatprep.subr.mxu0 0.0
      %472 = vmatpush2.msra.mxu0 0.0
      %473 = vmatprep.mubr.f32.mxu0 0.0
      %474 = vmatmul.mubr.f32.gmra.mxu0 %v394
      %v475 = vpop.f32.mrf.mxu0
      %v476 = vadd.f32 %v390, %v475
      %v477 = vpop.f32.mrf.mxu0
      %478 = vmatprep.mubr.f32.mxu0 0.0
      %479 = vmatmul.mubr.f32.gmra.mxu0 %v397
      %v480 = vpop.f32.mrf.mxu0
      %v481 = vadd.f32 %v390, %v480
      %v482 = vpop.f32.mrf.mxu0
      %483 = vmatprep.mubr.f32.mxu0 0.0
      %484 = vmatmul.mubr.f32.gmra.mxu0 %v400
      %v485 = vpop.f32.mrf.mxu0
      %v486 = vadd.f32 %v390, %v485
      %v487 = vpop.f32.mrf.mxu0
      %488 = vmatprep.mubr.f32.mxu0 0.0
      %489 = vmatmul.mubr.f32.gmra.mxu0 %v403
      %v490 = vpop.f32.mrf.mxu0
      %v491 = vadd.f32 %v390, %v490
      %v492 = vpop.f32.mrf.mxu0
      %493 = vdwg.mxu0
      %vm494 = vcmask 523264
      %495 = vst.msk [vmem:[#allocation4] sm:$0xff] %vm494, %v476
      %496 = vst.msk [vmem:[#allocation4 + $0x8] sm:$0xff] %vm494, %v481
      %497 = vst.msk [vmem:[#allocation4 + $0x10] sm:$0xff] %vm494, %v486
      %498 = vst.msk [vmem:[#allocation4 + $0x18] sm:$0xff] %vm494, %v491
      %v499 = vld [vmem:[%s3] sm:$0xff]
      %v500 = vld [vmem:[%s3 + $0x8] sm:$0xff]
      %v501 = vld [vmem:[#allocation2] sm:$0xff]
      %v502 = vld [vmem:[#allocation3] sm:$0xff]
      %v503 = vlaneseq
      %v504 = vand.u32 %v503, 127
      %vm505 = vcmp.ge.s32.totalorder %v504, 32
      %vm506 = vcmp.lt.s32.totalorder %v504, 48
      %vm507 = vmand %vm505, %vm506
      %v508 = vld [vmem:[#allocation4] sm:$0xff]
      %vm509 = vcmask 130048
      %v511 = vsel %vm509, %v501, 0
      %513 = vmatprep.subr.mxu0 0.0
      %514 = vmatpush1.msra.mxu0 0.0
      %515 = vmatprep.subr.mxu0 0.0
      %516 = vmatpush1.msra.mxu0 0.0
      %517 = vmatprep.subr.mxu0 0.0
      %518 = vmatpush1.msra.mxu0 0.0
      %519 = vmatprep.subr.mxu0 0.0
      %520 = vmatpush1.msra.mxu0 0.0
      %521 = vmatprep.subr.mxu0 0.0
      %522 = vmatpush1.msra.mxu0 0.0
      %523 = vmatprep.subr.mxu0 0.0
      %524 = vmatpush1.msra.mxu0 0.0
      %525 = vmatprep.subr.mxu0 0.0
      %526 = vmatpush1.msra.mxu0 0.0
      %527 = vmatprep.subr.mxu0 0.0
      %528 = vmatpush1.msra.mxu0 0.0
      %529 = vmatprep.subr.mxu0 0.0
      %530 = vmatpush1.msra.mxu0 0.0
      %531 = vmatprep.subr.mxu0 0.0
      %532 = vmatpush1.msra.mxu0 0.0
      %533 = vmatprep.subr.mxu0 0.0
      %534 = vmatpush1.msra.mxu0 0.0
      %535 = vmatprep.subr.mxu0 0.0
      %536 = vmatpush1.msra.mxu0 0.0
      %537 = vmatprep.subr.mxu0 0.0
      %538 = vmatpush1.msra.mxu0 0.0
      %539 = vmatprep.subr.mxu0 0.0
      %540 = vmatpush1.msra.mxu0 0.0
      %541 = vmatprep.subr.mxu0 0.0
      %542 = vmatpush1.msra.mxu0 %v500
      %543 = vmatprep.subr.mxu0 0.0
      %544 = vmatpush1.msra.mxu0 %v499
      %545 = vmatprep.subr.mxu0 0.0
      %546 = vmatpush2.msra.mxu0 0.0
      %547 = vmatprep.subr.mxu0 0.0
      %548 = vmatpush2.msra.mxu0 0.0
      %549 = vmatprep.subr.mxu0 0.0
      %550 = vmatpush2.msra.mxu0 0.0
      %551 = vmatprep.subr.mxu0 0.0
      %552 = vmatpush2.msra.mxu0 0.0
      %553 = vmatprep.subr.mxu0 0.0
      %554 = vmatpush2.msra.mxu0 0.0
      %555 = vmatprep.subr.mxu0 0.0
      %556 = vmatpush2.msra.mxu0 0.0
      %557 = vmatprep.subr.mxu0 0.0
      %558 = vmatpush2.msra.mxu0 0.0
      %559 = vmatprep.subr.mxu0 0.0
      %560 = vmatpush2.msra.mxu0 0.0
      %561 = vmatprep.subr.mxu0 0.0
      %562 = vmatpush2.msra.mxu0 0.0
      %563 = vmatprep.subr.mxu0 0.0
      %564 = vmatpush2.msra.mxu0 0.0
      %565 = vmatprep.subr.mxu0 0.0
      %566 = vmatpush2.msra.mxu0 0.0
      %567 = vmatprep.subr.mxu0 0.0
      %568 = vmatpush2.msra.mxu0 0.0
      %569 = vmatprep.subr.mxu0 0.0
      %570 = vmatpush2.msra.mxu0 0.0
      %571 = vmatprep.subr.mxu0 0.0
      %572 = vmatpush2.msra.mxu0 0.0
      %573 = vmatprep.subr.mxu0 0.0
      %574 = vmatpush2.msra.mxu0 0.0
      %575 = vmatprep.subr.mxu0 0.0
      %576 = vmatpush2.msra.mxu0 0.0
      %577 = vmatprep.mubr.f32.mxu0 0.0
      %578 = vmatmul.mubr.f32.gmra.mxu0 %v511
      %v579 = vpop.f32.mrf.mxu0
      %v580 = vadd.f32 0.0, %v579
      %v581 = vpop.f32.mrf.mxu0
      %582 = vdwg.mxu0
      %v583 = vadd.f32 %v508, %v580
      %v584 = vtanh.pop %v583
      %v585 = vxor.u32 %v583, 2147483648
      %v586 = vmul.f32 %v585, 1.442695
      %v587 = vpow.pop %v586
      %v588 = vadd.f32 %v587, 1.0
      %v589 = vrcp.pop %v588
      %v590 = vmul.f32 1.0, %v589
      %v591 = vsel %vm507, %v584, %v590
      %593 = vrot.lane.b32.xlu0 %v502, 16
      %v594 = vpop.permute.xlu0 %593
      %v596 = vmul.f32 %v591, %v594
      %598 = vrot.lane.b32.xlu0 %v591, 96
      %v599 = vpop.permute.xlu0 %598
      %v601 = vmul.f32 %v591, %v599
      %603 = vrot.lane.b32.xlu0 %v601, 16
      %v604 = vpop.permute.xlu0 %603
      %v606 = vadd.f32 %v596, %v604
      %v607 = vtanh.pop %v606
      %609 = vrot.lane.b32.xlu0 %v607, 32
      %v610 = vpop.permute.xlu0 %609
      %v612 = vmul.f32 %v591, %v610
      %614 = vrot.lane.b32.xlu0 %v612, 80
      %v615 = vpop.permute.xlu0 %614
      %617 = vst.msk [vmem:[#allocation5] sm:$0xff] %vm509, %v615
      %s618 = scalar_lea.vmem [#allocation4], 8
      %v619 = vld [vmem:[%s618] sm:$0xff]
      %v620 = vsel %vm509, %v615, 0
      %622 = vmatprep.subr.mxu0 0.0
      %623 = vmatpush1.msra.mxu0 0.0
      %624 = vmatprep.subr.mxu0 0.0
      %625 = vmatpush1.msra.mxu0 0.0
      %626 = vmatprep.subr.mxu0 0.0
      %627 = vmatpush1.msra.mxu0 0.0
      %628 = vmatprep.subr.mxu0 0.0
      %629 = vmatpush1.msra.mxu0 0.0
      %630 = vmatprep.subr.mxu0 0.0
      %631 = vmatpush1.msra.mxu0 0.0
      %632 = vmatprep.subr.mxu0 0.0
      %633 = vmatpush1.msra.mxu0 0.0
      %634 = vmatprep.subr.mxu0 0.0
      %635 = vmatpush1.msra.mxu0 0.0
      %636 = vmatprep.subr.mxu0 0.0
      %637 = vmatpush1.msra.mxu0 0.0
      %638 = vmatprep.subr.mxu0 0.0
      %639 = vmatpush1.msra.mxu0 0.0
      %640 = vmatprep.subr.mxu0 0.0
      %641 = vmatpush1.msra.mxu0 0.0
      %642 = vmatprep.subr.mxu0 0.0
      %643 = vmatpush1.msra.mxu0 0.0
      %644 = vmatprep.subr.mxu0 0.0
      %645 = vmatpush1.msra.mxu0 0.0
      %646 = vmatprep.subr.mxu0 0.0
      %647 = vmatpush1.msra.mxu0 0.0
      %648 = vmatprep.subr.mxu0 0.0
      %649 = vmatpush1.msra.mxu0 0.0
      %650 = vmatprep.subr.mxu0 0.0
      %651 = vmatpush1.msra.mxu0 %v500
      %652 = vmatprep.subr.mxu0 0.0
      %653 = vmatpush1.msra.mxu0 %v499
      %654 = vmatprep.subr.mxu0 0.0
      %655 = vmatpush2.msra.mxu0 0.0
      %656 = vmatprep.subr.mxu0 0.0
      %657 = vmatpush2.msra.mxu0 0.0
      %658 = vmatprep.subr.mxu0 0.0
      %659 = vmatpush2.msra.mxu0 0.0
      %660 = vmatprep.subr.mxu0 0.0
      %661 = vmatpush2.msra.mxu0 0.0
      %662 = vmatprep.subr.mxu0 0.0
      %663 = vmatpush2.msra.mxu0 0.0
      %664 = vmatprep.subr.mxu0 0.0
      %665 = vmatpush2.msra.mxu0 0.0
      %666 = vmatprep.subr.mxu0 0.0
      %667 = vmatpush2.msra.mxu0 0.0
      %668 = vmatprep.subr.mxu0 0.0
      %669 = vmatpush2.msra.mxu0 0.0
      %670 = vmatprep.subr.mxu0 0.0
      %671 = vmatpush2.msra.mxu0 0.0
      %672 = vmatprep.subr.mxu0 0.0
      %673 = vmatpush2.msra.mxu0 0.0
      %674 = vmatprep.subr.mxu0 0.0
      %675 = vmatpush2.msra.mxu0 0.0
      %676 = vmatprep.subr.mxu0 0.0
      %677 = vmatpush2.msra.mxu0 0.0
      %678 = vmatprep.subr.mxu0 0.0
      %679 = vmatpush2.msra.mxu0 0.0
      %680 = vmatprep.subr.mxu0 0.0
      %681 = vmatpush2.msra.mxu0 0.0
      %682 = vmatprep.subr.mxu0 0.0
      %683 = vmatpush2.msra.mxu0 0.0
      %684 = vmatprep.subr.mxu0 0.0
      %685 = vmatpush2.msra.mxu0 0.0
      %686 = vmatprep.mubr.f32.mxu0 0.0
      %687 = vmatmul.mubr.f32.gmra.mxu0 %v620
      %v688 = vpop.f32.mrf.mxu0
      %v689 = vadd.f32 0.0, %v688
      %v690 = vpop.f32.mrf.mxu0
      %691 = vdwg.mxu0
      %v692 = vadd.f32 %v619, %v689
      %v693 = vtanh.pop %v692
      %v694 = vxor.u32 %v692, 2147483648
      %v695 = vmul.f32 %v694, 1.442695
      %v696 = vpow.pop %v695
      %v697 = vadd.f32 %v696, 1.0
      %v698 = vrcp.pop %v697
      %v699 = vmul.f32 1.0, %v698
      %v700 = vsel %vm507, %v693, %v699
      %v701 = vmul.f32 %v700, %v606
      %703 = vrot.lane.b32.xlu0 %v700, 96
      %v704 = vpop.permute.xlu0 %703
      %v706 = vmul.f32 %v700, %v704
      %708 = vrot.lane.b32.xlu0 %v706, 16
      %v709 = vpop.permute.xlu0 %708
      %v711 = vadd.f32 %v701, %v709
      %v712 = vtanh.pop %v711
      %714 = vrot.lane.b32.xlu0 %v712, 32
      %v715 = vpop.permute.xlu0 %714
      %v717 = vmul.f32 %v700, %v715
      %719 = vrot.lane.b32.xlu0 %v717, 80
      %v720 = vpop.permute.xlu0 %719
      %s722 = scalar_lea.vmem [#allocation5], 8
      %723 = vst.msk [vmem:[%s722] sm:$0xff] %vm509, %v720
      %s724 = scalar_lea.vmem [#allocation4], 16
      %v725 = vld [vmem:[%s724] sm:$0xff]
      %v726 = vsel %vm509, %v720, 0
      %728 = vmatprep.subr.mxu0 0.0
      %729 = vmatpush1.msra.mxu0 0.0
      %730 = vmatprep.subr.mxu0 0.0
      %731 = vmatpush1.msra.mxu0 0.0
      %732 = vmatprep.subr.mxu0 0.0
      %733 = vmatpush1.msra.mxu0 0.0
      %734 = vmatprep.subr.mxu0 0.0
      %735 = vmatpush1.msra.mxu0 0.0
      %736 = vmatprep.subr.mxu0 0.0
      %737 = vmatpush1.msra.mxu0 0.0
      %738 = vmatprep.subr.mxu0 0.0
      %739 = vmatpush1.msra.mxu0 0.0
      %740 = vmatprep.subr.mxu0 0.0
      %741 = vmatpush1.msra.mxu0 0.0
      %742 = vmatprep.subr.mxu0 0.0
      %743 = vmatpush1.msra.mxu0 0.0
      %744 = vmatprep.subr.mxu0 0.0
      %745 = vmatpush1.msra.mxu0 0.0
      %746 = vmatprep.subr.mxu0 0.0
      %747 = vmatpush1.msra.mxu0 0.0
      %748 = vmatprep.subr.mxu0 0.0
      %749 = vmatpush1.msra.mxu0 0.0
      %750 = vmatprep.subr.mxu0 0.0
      %751 = vmatpush1.msra.mxu0 0.0
      %752 = vmatprep.subr.mxu0 0.0
      %753 = vmatpush1.msra.mxu0 0.0
      %754 = vmatprep.subr.mxu0 0.0
      %755 = vmatpush1.msra.mxu0 0.0
      %756 = vmatprep.subr.mxu0 0.0
      %757 = vmatpush1.msra.mxu0 %v500
      %758 = vmatprep.subr.mxu0 0.0
      %759 = vmatpush1.msra.mxu0 %v499
      %760 = vmatprep.subr.mxu0 0.0
      %761 = vmatpush2.msra.mxu0 0.0
      %762 = vmatprep.subr.mxu0 0.0
      %763 = vmatpush2.msra.mxu0 0.0
      %764 = vmatprep.subr.mxu0 0.0
      %765 = vmatpush2.msra.mxu0 0.0
      %766 = vmatprep.subr.mxu0 0.0
      %767 = vmatpush2.msra.mxu0 0.0
      %768 = vmatprep.subr.mxu0 0.0
      %769 = vmatpush2.msra.mxu0 0.0
      %770 = vmatprep.subr.mxu0 0.0
      %771 = vmatpush2.msra.mxu0 0.0
      %772 = vmatprep.subr.mxu0 0.0
      %773 = vmatpush2.msra.mxu0 0.0
      %774 = vmatprep.subr.mxu0 0.0
      %775 = vmatpush2.msra.mxu0 0.0
      %776 = vmatprep.subr.mxu0 0.0
      %777 = vmatpush2.msra.mxu0 0.0
      %778 = vmatprep.subr.mxu0 0.0
      %779 = vmatpush2.msra.mxu0 0.0
      %780 = vmatprep.subr.mxu0 0.0
      %781 = vmatpush2.msra.mxu0 0.0
      %782 = vmatprep.subr.mxu0 0.0
      %783 = vmatpush2.msra.mxu0 0.0
      %784 = vmatprep.subr.mxu0 0.0
      %785 = vmatpush2.msra.mxu0 0.0
      %786 = vmatprep.subr.mxu0 0.0
      %787 = vmatpush2.msra.mxu0 0.0
      %788 = vmatprep.subr.mxu0 0.0
      %789 = vmatpush2.msra.mxu0 0.0
      %790 = vmatprep.subr.mxu0 0.0
      %791 = vmatpush2.msra.mxu0 0.0
      %792 = vmatprep.mubr.f32.mxu0 0.0
      %793 = vmatmul.mubr.f32.gmra.mxu0 %v726
      %v794 = vpop.f32.mrf.mxu0
      %v795 = vadd.f32 0.0, %v794
      %v796 = vpop.f32.mrf.mxu0
      %797 = vdwg.mxu0
      %v798 = vadd.f32 %v725, %v795
      %v799 = vtanh.pop %v798
      %v800 = vxor.u32 %v798, 2147483648
      %v801 = vmul.f32 %v800, 1.442695
      %v802 = vpow.pop %v801
      %v803 = vadd.f32 %v802, 1.0
      %v804 = vrcp.pop %v803
      %v805 = vmul.f32 1.0, %v804
      %v806 = vsel %vm507, %v799, %v805
      %v807 = vmul.f32 %v806, %v711
      %809 = vrot.lane.b32.xlu0 %v806, 96
      %v810 = vpop.permute.xlu0 %809
      %v812 = vmul.f32 %v806, %v810
      %814 = vrot.lane.b32.xlu0 %v812, 16
      %v815 = vpop.permute.xlu0 %814
      %v817 = vadd.f32 %v807, %v815
      %v818 = vtanh.pop %v817
      %820 = vrot.lane.b32.xlu0 %v818, 32
      %v821 = vpop.permute.xlu0 %820
      %v823 = vmul.f32 %v806, %v821
      %825 = vrot.lane.b32.xlu0 %v823, 80
      %v826 = vpop.permute.xlu0 %825
      %s828 = scalar_lea.vmem [#allocation5], 16
      %829 = vst.msk [vmem:[%s828] sm:$0xff] %vm509, %v826
      %s830 = scalar_lea.vmem [#allocation4], 24
      %v831 = vld [vmem:[%s830] sm:$0xff]
      %v832 = vsel %vm509, %v826, 0
      %834 = vmatprep.subr.mxu0 0.0
      %835 = vmatpush1.msra.mxu0 0.0
      %836 = vmatprep.subr.mxu0 0.0
      %837 = vmatpush1.msra.mxu0 0.0
      %838 = vmatprep.subr.mxu0 0.0
      %839 = vmatpush1.msra.mxu0 0.0
      %840 = vmatprep.subr.mxu0 0.0
      %841 = vmatpush1.msra.mxu0 0.0
      %842 = vmatprep.subr.mxu0 0.0
      %843 = vmatpush1.msra.mxu0 0.0
      %844 = vmatprep.subr.mxu0 0.0
      %845 = vmatpush1.msra.mxu0 0.0
      %846 = vmatprep.subr.mxu0 0.0
      %847 = vmatpush1.msra.mxu0 0.0
      %848 = vmatprep.subr.mxu0 0.0
      %849 = vmatpush1.msra.mxu0 0.0
      %850 = vmatprep.subr.mxu0 0.0
      %851 = vmatpush1.msra.mxu0 0.0
      %852 = vmatprep.subr.mxu0 0.0
      %853 = vmatpush1.msra.mxu0 0.0
      %854 = vmatprep.subr.mxu0 0.0
      %855 = vmatpush1.msra.mxu0 0.0
      %856 = vmatprep.subr.mxu0 0.0
      %857 = vmatpush1.msra.mxu0 0.0
      %858 = vmatprep.subr.mxu0 0.0
      %859 = vmatpush1.msra.mxu0 0.0
      %860 = vmatprep.subr.mxu0 0.0
      %861 = vmatpush1.msra.mxu0 0.0
      %862 = vmatprep.subr.mxu0 0.0
      %863 = vmatpush1.msra.mxu0 %v500
      %864 = vmatprep.subr.mxu0 0.0
      %865 = vmatpush1.msra.mxu0 %v499
      %866 = vmatprep.subr.mxu0 0.0
      %867 = vmatpush2.msra.mxu0 0.0
      %868 = vmatprep.subr.mxu0 0.0
      %869 = vmatpush2.msra.mxu0 0.0
      %870 = vmatprep.subr.mxu0 0.0
      %871 = vmatpush2.msra.mxu0 0.0
      %872 = vmatprep.subr.mxu0 0.0
      %873 = vmatpush2.msra.mxu0 0.0
      %874 = vmatprep.subr.mxu0 0.0
      %875 = vmatpush2.msra.mxu0 0.0
      %876 = vmatprep.subr.mxu0 0.0
      %877 = vmatpush2.msra.mxu0 0.0
      %878 = vmatprep.subr.mxu0 0.0
      %879 = vmatpush2.msra.mxu0 0.0
      %880 = vmatprep.subr.mxu0 0.0
      %881 = vmatpush2.msra.mxu0 0.0
      %882 = vmatprep.subr.mxu0 0.0
      %883 = vmatpush2.msra.mxu0 0.0
      %884 = vmatprep.subr.mxu0 0.0
      %885 = vmatpush2.msra.mxu0 0.0
      %886 = vmatprep.subr.mxu0 0.0
      %887 = vmatpush2.msra.mxu0 0.0
      %888 = vmatprep.subr.mxu0 0.0
      %889 = vmatpush2.msra.mxu0 0.0
      %890 = vmatprep.subr.mxu0 0.0
      %891 = vmatpush2.msra.mxu0 0.0
      %892 = vmatprep.subr.mxu0 0.0
      %893 = vmatpush2.msra.mxu0 0.0
      %894 = vmatprep.subr.mxu0 0.0
      %895 = vmatpush2.msra.mxu0 0.0
      %896 = vmatprep.subr.mxu0 0.0
      %897 = vmatpush2.msra.mxu0 0.0
      %898 = vmatprep.mubr.f32.mxu0 0.0
      %899 = vmatmul.mubr.f32.gmra.mxu0 %v832
      %v900 = vpop.f32.mrf.mxu0
      %v901 = vadd.f32 0.0, %v900
      %v902 = vpop.f32.mrf.mxu0
      %903 = vdwg.mxu0
      %v904 = vadd.f32 %v831, %v901
      %v905 = vtanh.pop %v904
      %v906 = vxor.u32 %v904, 2147483648
      %v907 = vmul.f32 %v906, 1.442695
      %v908 = vpow.pop %v907
      %v909 = vadd.f32 %v908, 1.0
      %v910 = vrcp.pop %v909
      %v911 = vmul.f32 1.0, %v910
      %v912 = vsel %vm507, %v905, %v911
      %v913 = vmul.f32 %v912, %v817
      %915 = vrot.lane.b32.xlu0 %v912, 96
      %v916 = vpop.permute.xlu0 %915
      %v918 = vmul.f32 %v912, %v916
      %920 = vrot.lane.b32.xlu0 %v918, 16
      %v921 = vpop.permute.xlu0 %920
      %v923 = vadd.f32 %v913, %v921
      %v924 = vtanh.pop %v923
      %926 = vrot.lane.b32.xlu0 %v924, 32
      %v927 = vpop.permute.xlu0 %926
      %v929 = vmul.f32 %v912, %v927
      %931 = vrot.lane.b32.xlu0 %v929, 80
      %v932 = vpop.permute.xlu0 %931
      %s934 = scalar_lea.vmem [#allocation5], 24
      %935 = vst.msk [vmem:[%s934] sm:$0xff] %vm509, %v932
      %936 = vst.msk [vmem:[#allocation2] sm:$0xff] %vm509, %v932
      %938 = vrot.lane.b32.xlu0 %v923, 112
      %v939 = vpop.permute.xlu0 %938
      %941 = vst.msk [vmem:[#allocation3] sm:$0xff] %vm509, %v939
      %v942 = vld [vmem:[#allocation5] sm:$0xff]
      %v943 = vld [vmem:[#allocation5 + $0x8] sm:$0xff]
      %v944 = vld [vmem:[#allocation5 + $0x10] sm:$0xff]
      %v945 = vld [vmem:[#allocation5 + $0x18] sm:$0xff]
      %v946 = vld [vmem:[%s362] sm:$0xff]
      %v947 = vld [vmem:[%s362 + $0x8] sm:$0xff]
      %v948 = vld [vmem:[%s362 + $0x10] sm:$0xff]
      %v949 = vld [vmem:[%s362 + $0x18] sm:$0xff]
      %v950 = vld [vmem:[%s5] sm:$0xff]
      %v951 = vld [vmem:[%s5 + $0x8] sm:$0xff]
      %v952 = vld [vmem:[%s6] sm:$0x1]
      %v954 = vlaneseq
      %v955 = vshrl.u32 %v954, 7
      %v956 = vsub.s32 0, %v955
      %v957 = vrot.slane %v952, %v956
      %v960 = vsel %vm509, %v942, 0
      %v963 = vsel %vm509, %v943, 0
      %v966 = vsel %vm509, %v944, 0
      %v969 = vsel %vm509, %v945, 0
      %971 = vmatprep.subr.mxu0 0.0
      %972 = vmatpush1.msra.mxu0 0.0
      %973 = vmatprep.subr.mxu0 0.0
      %974 = vmatpush1.msra.mxu0 0.0
      %975 = vmatprep.subr.mxu0 0.0
      %976 = vmatpush1.msra.mxu0 0.0
      %977 = vmatprep.subr.mxu0 0.0
      %978 = vmatpush1.msra.mxu0 0.0
      %979 = vmatprep.subr.mxu0 0.0
      %980 = vmatpush1.msra.mxu0 0.0
      %981 = vmatprep.subr.mxu0 0.0
      %982 = vmatpush1.msra.mxu0 0.0
      %983 = vmatprep.subr.mxu0 0.0
      %984 = vmatpush1.msra.mxu0 0.0
      %985 = vmatprep.subr.mxu0 0.0
      %986 = vmatpush1.msra.mxu0 0.0
      %987 = vmatprep.subr.mxu0 0.0
      %988 = vmatpush1.msra.mxu0 0.0
      %989 = vmatprep.subr.mxu0 0.0
      %990 = vmatpush1.msra.mxu0 0.0
      %991 = vmatprep.subr.mxu0 0.0
      %992 = vmatpush1.msra.mxu0 0.0
      %993 = vmatprep.subr.mxu0 0.0
      %994 = vmatpush1.msra.mxu0 0.0
      %995 = vmatprep.subr.mxu0 0.0
      %996 = vmatpush1.msra.mxu0 0.0
      %997 = vmatprep.subr.mxu0 0.0
      %998 = vmatpush1.msra.mxu0 0.0
      %999 = vmatprep.subr.mxu0 0.0
      %1000 = vmatpush1.msra.mxu0 %v951
      %1001 = vmatprep.subr.mxu0 0.0
      %1002 = vmatpush1.msra.mxu0 %v950
      %1003 = vmatprep.subr.mxu0 0.0
      %1004 = vmatpush2.msra.mxu0 0.0
      %1005 = vmatprep.subr.mxu0 0.0
      %1006 = vmatpush2.msra.mxu0 0.0
      %1007 = vmatprep.subr.mxu0 0.0
      %1008 = vmatpush2.msra.mxu0 0.0
      %1009 = vmatprep.subr.mxu0 0.0
      %1010 = vmatpush2.msra.mxu0 0.0
      %1011 = vmatprep.subr.mxu0 0.0
      %1012 = vmatpush2.msra.mxu0 0.0
      %1013 = vmatprep.subr.mxu0 0.0
      %1014 = vmatpush2.msra.mxu0 0.0
      %1015 = vmatprep.subr.mxu0 0.0
      %1016 = vmatpush2.msra.mxu0 0.0
      %1017 = vmatprep.subr.mxu0 0.0
      %1018 = vmatpush2.msra.mxu0 0.0
      %1019 = vmatprep.subr.mxu0 0.0
      %1020 = vmatpush2.msra.mxu0 0.0
      %1021 = vmatprep.subr.mxu0 0.0
      %1022 = vmatpush2.msra.mxu0 0.0
      %1023 = vmatprep.subr.mxu0 0.0
      %1024 = vmatpush2.msra.mxu0 0.0
      %1025 = vmatprep.subr.mxu0 0.0
      %1026 = vmatpush2.msra.mxu0 0.0
      %1027 = vmatprep.subr.mxu0 0.0
      %1028 = vmatpush2.msra.mxu0 0.0
      %1029 = vmatprep.subr.mxu0 0.0
      %1030 = vmatpush2.msra.mxu0 0.0
      %1031 = vmatprep.subr.mxu0 0.0
      %1032 = vmatpush2.msra.mxu0 0.0
      %1033 = vmatprep.subr.mxu0 0.0
      %1034 = vmatpush2.msra.mxu0 0.0
      %1035 = vmatprep.mubr.f32.mxu0 0.0
      %1036 = vmatmul.mubr.f32.gmra.mxu0 %v960
      %v1037 = vpop.f32.mrf.mxu0
      %v1038 = vadd.f32 %v957, %v1037
      %v1039 = vpop.f32.mrf.mxu0
      %1040 = vmatprep.mubr.f32.mxu0 0.0
      %1041 = vmatmul.mubr.f32.gmra.mxu0 %v963
      %v1042 = vpop.f32.mrf.mxu0
      %v1043 = vadd.f32 %v957, %v1042
      %v1044 = vpop.f32.mrf.mxu0
      %1045 = vmatprep.mubr.f32.mxu0 0.0
      %1046 = vmatmul.mubr.f32.gmra.mxu0 %v966
      %v1047 = vpop.f32.mrf.mxu0
      %v1048 = vadd.f32 %v957, %v1047
      %v1049 = vpop.f32.mrf.mxu0
      %1050 = vmatprep.mubr.f32.mxu0 0.0
      %1051 = vmatmul.mubr.f32.gmra.mxu0 %v969
      %v1052 = vpop.f32.mrf.mxu0
      %v1053 = vadd.f32 %v957, %v1052
      %v1054 = vpop.f32.mrf.mxu0
      %1055 = vdwg.mxu0
      %v1056 = vmul.f32 %v1038, 0.5
      %v1057 = vmul.f32 %v1043, 0.5
      %v1058 = vmul.f32 %v1048, 0.5
      %v1059 = vmul.f32 %v1053, 0.5
      %v1060 = vmul.f32 %v1056, 1.442695
      %v1061 = vpow.pop %v1060
      %v1062 = vmul.f32 %v1057, 1.442695
      %v1063 = vpow.pop %v1062
      %v1064 = vmul.f32 %v1058, 1.442695
      %v1065 = vpow.pop %v1064
      %v1066 = vmul.f32 %v1059, 1.442695
      %v1067 = vpow.pop %v1066
      %1072 = vrot.lane.b32.xlu0 %v1061, 126
      %v1073 = vpop.permute.xlu0 %1072
      %1074 = vrot.lane.b32.xlu0 %v1063, 126
      %v1075 = vpop.permute.xlu0 %1074
      %1076 = vrot.lane.b32.xlu0 %v1065, 126
      %v1077 = vpop.permute.xlu0 %1076
      %1078 = vrot.lane.b32.xlu0 %v1067, 126
      %v1079 = vpop.permute.xlu0 %1078
      %v1084 = vmul.f32 %v946, %v1073
      %v1085 = vmul.f32 %v947, %v1075
      %v1086 = vmul.f32 %v948, %v1077
      %v1087 = vmul.f32 %v949, %v1079
      %v1088 = vadd.f32 %v1038, %v1084
      %v1089 = vadd.f32 %v1043, %v1085
      %v1090 = vadd.f32 %v1048, %v1086
      %v1091 = vadd.f32 %v1053, %v1087
      %v1092 = vld [vmem:[%s7] sm:$0x3]
      %v1094 = vsel %vm392, %v1088, 0
      %v1097 = vsel %vm392, %v1089, 0
      %v1100 = vsel %vm392, %v1090, 0
      %v1103 = vsel %vm392, %v1091, 0
      %v1106 = vsel %vm405, %v1092, 0
      %1108 = vmatprep.subr.mxu0 0.0
      %1109 = vmatpush1.msra.mxu0 0.0
      %1110 = vmatprep.subr.mxu0 0.0
      %1111 = vmatpush1.msra.mxu0 0.0
      %1112 = vmatprep.subr.mxu0 0.0
      %1113 = vmatpush1.msra.mxu0 0.0
      %1114 = vmatprep.subr.mxu0 0.0
      %1115 = vmatpush1.msra.mxu0 0.0
      %1116 = vmatprep.subr.mxu0 0.0
      %1117 = vmatpush1.msra.mxu0 0.0
      %1118 = vmatprep.subr.mxu0 0.0
      %1119 = vmatpush1.msra.mxu0 0.0
      %1120 = vmatprep.subr.mxu0 0.0
      %1121 = vmatpush1.msra.mxu0 0.0
      %1122 = vmatprep.subr.mxu0 0.0
      %1123 = vmatpush1.msra.mxu0 0.0
      %1124 = vmatprep.subr.mxu0 0.0
      %1125 = vmatpush1.msra.mxu0 0.0
      %1126 = vmatprep.subr.mxu0 0.0
      %1127 = vmatpush1.msra.mxu0 0.0
      %1128 = vmatprep.subr.mxu0 0.0
      %1129 = vmatpush1.msra.mxu0 0.0
      %1130 = vmatprep.subr.mxu0 0.0
      %1131 = vmatpush1.msra.mxu0 0.0
      %1132 = vmatprep.subr.mxu0 0.0
      %1133 = vmatpush1.msra.mxu0 0.0
      %1134 = vmatprep.subr.mxu0 0.0
      %1135 = vmatpush1.msra.mxu0 0.0
      %1136 = vmatprep.subr.mxu0 0.0
      %1137 = vmatpush1.msra.mxu0 0.0
      %1138 = vmatprep.subr.mxu0 0.0
      %1139 = vmatpush1.msra.mxu0 %v1106
      %1140 = vmatprep.subr.mxu0 0.0
      %1141 = vmatpush2.msra.mxu0 0.0
      %1142 = vmatprep.subr.mxu0 0.0
      %1143 = vmatpush2.msra.mxu0 0.0
      %1144 = vmatprep.subr.mxu0 0.0
      %1145 = vmatpush2.msra.mxu0 0.0
      %1146 = vmatprep.subr.mxu0 0.0
      %1147 = vmatpush2.msra.mxu0 0.0
      %1148 = vmatprep.subr.mxu0 0.0
      %1149 = vmatpush2.msra.mxu0 0.0
      %1150 = vmatprep.subr.mxu0 0.0
      %1151 = vmatpush2.msra.mxu0 0.0
      %1152 = vmatprep.subr.mxu0 0.0
      %1153 = vmatpush2.msra.mxu0 0.0
      %1154 = vmatprep.subr.mxu0 0.0
      %1155 = vmatpush2.msra.mxu0 0.0
      %1156 = vmatprep.subr.mxu0 0.0
      %1157 = vmatpush2.msra.mxu0 0.0
      %1158 = vmatprep.subr.mxu0 0.0
      %1159 = vmatpush2.msra.mxu0 0.0
      %1160 = vmatprep.subr.mxu0 0.0
      %1161 = vmatpush2.msra.mxu0 0.0
      %1162 = vmatprep.subr.mxu0 0.0
      %1163 = vmatpush2.msra.mxu0 0.0
      %1164 = vmatprep.subr.mxu0 0.0
      %1165 = vmatpush2.msra.mxu0 0.0
      %1166 = vmatprep.subr.mxu0 0.0
      %1167 = vmatpush2.msra.mxu0 0.0
      %1168 = vmatprep.subr.mxu0 0.0
      %1169 = vmatpush2.msra.mxu0 0.0
      %1170 = vmatprep.subr.mxu0 0.0
      %1171 = vmatpush2.msra.mxu0 0.0
      %1172 = vmatprep.mubr.f32.mxu0 0.0
      %1173 = vmatmul.mubr.f32.gmra.mxu0 %v1094
      %v1174 = vpop.f32.mrf.mxu0
      %v1175 = vadd.f32 0.0, %v1174
      %v1176 = vpop.f32.mrf.mxu0
      %1177 = vmatprep.mubr.f32.mxu0 0.0
      %1178 = vmatmul.mubr.f32.gmra.mxu0 %v1097
      %v1179 = vpop.f32.mrf.mxu0
      %v1180 = vadd.f32 0.0, %v1179
      %v1181 = vpop.f32.mrf.mxu0
      %1182 = vmatprep.mubr.f32.mxu0 0.0
      %1183 = vmatmul.mubr.f32.gmra.mxu0 %v1100
      %v1184 = vpop.f32.mrf.mxu0
      %v1185 = vadd.f32 0.0, %v1184
      %v1186 = vpop.f32.mrf.mxu0
      %1187 = vmatprep.mubr.f32.mxu0 0.0
      %1188 = vmatmul.mubr.f32.gmra.mxu0 %v1103
      %v1189 = vpop.f32.mrf.mxu0
      %v1190 = vadd.f32 0.0, %v1189
      %v1191 = vpop.f32.mrf.mxu0
      %1192 = vdwg.mxu0
      %v1193 = vadd.f32 %v1038, %v1175
      %v1194 = vadd.f32 %v1043, %v1180
      %v1195 = vadd.f32 %v1048, %v1185
      %v1196 = vadd.f32 %v1053, %v1190
      %1197 = vst [vmem:[%s371] sm:$0xff] %v1193
      %1198 = vst [vmem:[%s371 + $0x8] sm:$0xff] %v1194
      %1199 = vst [vmem:[%s371 + $0x10] sm:$0xff] %v1195
      %1200 = vst [vmem:[%s371 + $0x18] sm:$0xff] %v1196
      %s1201 = smul.u32 4, %s24
      %p1202 = scmp.lt.s32.totalorder %s1201, 7
      %s1203 = scalar_select %p1202, %s1201, 7
      %p1204 = scmp.lt.s32.totalorder %s23, 0
      %s1205 = scalar_select %p1204, %s23, 0
      %s1206 = sadd.s32 %s1205, %s1203
      %s1207 = smul.addr %s1206, 8
      %s1208 = scalar_lea.vmem %s8, %s1207
      // Predicated region
      $region57: #{recurrent_vae_forward.1} parent=51 // pred_check
        %p1209 = pneg %p233
      $region58: #{recurrent_vae_forward.1} parent=51 // pred_check_branch
        %1211 = sbr.rel (%p1209) target = $region60
      $region59: #{recurrent_vae_forward.1} parent=51 // pred_region
        %s1212 = smul.u32 4, %s24
      $region60: #{recurrent_vae_forward.1} parent=51 // pred_fallthru
        _
    $region52: #{recurrent_vae_forward.1} parent=5 // pred_fallthru
      _
    %p1213 = scmp.le.s32.totalorder 2, %s14
    // Predicated region
    $region61: #{recurrent_vae_forward.1} parent=5 // pred_check
      %p1214 = pneg %p1213
    $region62: #{recurrent_vae_forward.1} parent=5 // pred_check_branch
      %1216 = sbr.rel (%p1214) target = $region64
    $region63: #{recurrent_vae_forward.1} parent=5 // pred_region
      %s1217 = ssub.s32 %s14, 2
      // Predicated region
      $region65: #{recurrent_vae_forward.1} parent=63 // pred_check
        %p1218 = pneg %p239
      $region66: #{recurrent_vae_forward.1} parent=63 // pred_check_branch
        %1220 = sbr.rel (%p1218) target = $region68
      $region67: #{recurrent_vae_forward.1} parent=63 // pred_region
        %s1221 = smul.u32 4, %s26
        %p1222 = scmp.lt.s32.totalorder %s1221, 7
        %s1223 = scalar_select %p1222, %s1221, 7
        %p1224 = scmp.lt.s32.totalorder %s25, 0
        %s1225 = scalar_select %p1224, %s25, 0
        %s1226 = sadd.s32 %s1225, %s1223
        %s1227 = smul.addr %s1226, 8
        %s1228 = scalar_lea.vmem %s8, %s1227
      $region68: #{recurrent_vae_forward.1} parent=63 // pred_fallthru
        _
    $region64: #{recurrent_vae_forward.1} parent=5 // pred_fallthru
      _
  $region6: #{recurrent_vae_forward.1} parent=0 // loop_footer
    %s18 = sadd.s32 1, %s14
  $region7: #{recurrent_vae_forward.1} parent=0 // loop_footer_branch
    %13 = sbr.rel target = $region3
  $region8: #{recurrent_vae_forward.1} parent=0 // loop_exit
    _

</llo_original>
